<compile_context>
chip_gen: v7x
topology: tpu7x:2x2x1
jax: 0.10.0
libtpu: 0.0.40
codegen_flags: <defaults>
</compile_context>

<pallas_src>
import functools

import jax
import jax.numpy as jnp
import numpy as np
from jax.experimental import pallas as pl
from jax.experimental.pallas import tpu as pltpu

EPS = 1e-5
EXPANSION = 4
NTAPS = 9
_VMEM = pltpu.MemorySpace.VMEM


# ----------------------------------------------------------------------------- kernel helpers

def _bn(y, g, b):
    """Training-mode BatchNorm folded to a scale/shift FMA epilogue.

    y: (C, M) f32; per-channel stats reduce over the lane axis (XLU path).
    g, b: (C, 1) f32.  Two-pass centered variance (no cancellation risk).
    """
    m = y.shape[1]
    mean = jnp.sum(y, axis=1, keepdims=True) * (1.0 / m)
    var = jnp.sum(jnp.square(y - mean), axis=1, keepdims=True) * (1.0 / m)
    scale = g * jax.lax.rsqrt(var + EPS)          # (C, 1)
    shift = b - mean * scale                      # (C, 1)
    return y * scale + shift                      # 2-op apply (mul + add)


def _bottleneck_kernel(*refs, n, h, w, ho, wo, stride, conv_shortcut):
    f32, bf16 = jnp.float32, jnp.bfloat16
    it = iter(refs)
    nxt = lambda: next(it)

    x_ref = nxt()
    xs_ref = nxt() if stride > 1 else None        # stride>1 implies conv shortcut
    w1_ref, w2_ref, w3_ref = nxt(), nxt(), nxt()
    ws_ref = nxt() if conv_shortcut else None
    mask_ref = nxt()
    dcol_ref = nxt() if stride > 1 else None
    g1, b1, g2, b2, g3, b3 = nxt(), nxt(), nxt(), nxt(), nxt(), nxt()
    gs, bs = (nxt(), nxt()) if conv_shortcut else (None, None)
    o_ref = nxt()
    hpad_ref = nxt()
    h2s_ref = nxt() if stride > 1 else None

    c = w1_ref.shape[0]                           # bottleneck width C
    m1 = n * h * w
    off = w + 1                                   # flat-shift margin

    x = x_ref[...]
    x_bf = x.astype(bf16)                         # no-op when x is already bf16

    # ---- stage 1: 1x1 conv + BN + ReLU                                  -> (C, M1) f32
    h1 = jnp.dot(w1_ref[...], x_bf, preferred_element_type=f32)
    h1 = jnp.maximum(_bn(h1, g1[...], b1[...]), 0.0)

    # ---- stage 2: 3x3 conv (pad=1) via flat-shifted slices of a margin-padded scratch.
    # Margins only need to be finite+zero (masked taps multiply by 0); interior is h1.
    hpad_ref[:, 0:off] = jnp.zeros((c, off), f32)
    hpad_ref[:, off + m1:off + m1 + off] = jnp.zeros((c, off), f32)
    hpad_ref[:, off:off + m1] = h1
    taps = []
    for t in range(NTAPS):
        kh, kw = t // 3, t % 3
        d = (kh - 1) * w + (kw - 1)
        slab = hpad_ref[:, off + d:off + d + m1]            # (C, M1), pure flat shift
        taps.append(slab * mask_ref[t:t + 1, :])            # zero row-wrap / padded positions
    gcat = jnp.concatenate(taps, axis=0).astype(bf16)       # (9C, M1) im2col
    h2f = jnp.dot(w2_ref[...], gcat, preferred_element_type=f32)   # stride-1 conv out, (C, M1)

    if stride == 1:
        h2 = h2f                                             # Mo == M1
    else:
        # Subsample to the stride-s output grid: pick rows s*oh (contiguous reads) and
        # columns s*ow via a tiny exact 0/1 selection GEMM (f32, per output row).
        dcol = dcol_ref[...]                                 # (W, Wo) 0/1
        for r in range(n * ho):
            nn, oh = r // ho, r % ho
            base = (nn * h + stride * oh) * w
            piece = h2f[:, base:base + w]                    # (C, W) even input row
            h2s_ref[:, r * wo:(r + 1) * wo] = jnp.dot(
                piece, dcol, preferred_element_type=f32)
        h2 = h2s_ref[...]                                    # (C, Mo)
    h2 = jnp.maximum(_bn(h2, g2[...], b2[...]), 0.0)

    # ---- stage 3: 1x1 expansion conv + BN                               -> (4C, Mo)
    y3 = _bn(jnp.dot(w3_ref[...], h2.astype(bf16), preferred_element_type=f32),
             g3[...], b3[...])

    # ---- shortcut branch
    if conv_shortcut:
        xsc = xs_ref[...] if stride > 1 else x_bf            # stride-1: reuse the same input
        sc = _bn(jnp.dot(ws_ref[...], xsc, preferred_element_type=f32), gs[...], bs[...])
    else:
        sc = x                                               # identity residual, f32, Mo == M1

    # ---- residual add + ReLU; Mo is a multiple of 128 -> unmasked lane-dense store
    o_ref[...] = jnp.maximum(y3 + sc, 0.0)


# ----------------------------------------------------------------------------- wrapper helpers

def _make_tap_masks(n, h, w):
    """(9, N*H*W) 0/1: mask[t, m]=1 iff tap t of output position m reads a real (non-pad) pixel."""
    masks = np.zeros((NTAPS, h, w), np.float32)
    for t in range(NTAPS):
        kh, kw = t // 3, t % 3
        hs = slice(max(0, 1 - kh), min(h, h + 1 - kh))
        ws_ = slice(max(0, 1 - kw), min(w, w + 1 - kw))
        masks[t, hs, ws_] = 1.0
    return np.tile(masks[:, None], (1, n, 1, 1)).reshape(NTAPS, n * h * w)


def _make_col_selector(w, wo, stride):
    """(W, Wo) 0/1 exact column subsampler: out[:, j] = in[:, stride*j]."""
    d = np.zeros((w, wo), np.float32)
    d[np.arange(wo) * stride, np.arange(wo)] = 1.0
    return d


# ----------------------------------------------------------------------------- forward

def bottleneck_forward_cm(x_cm, params, *, n, h, w, in_channels, out_channels, stride):
    """Channels-major forward: x_cm is (Cin, N*H*W) f32, returns (4*out_channels, N*Ho*Wo) f32."""
    C = out_channels
    exp_c = C * EXPANSION
    Cin = in_channels
    ho = (h + 2 - 3) // stride + 1
    wo = (w + 2 - 3) // stride + 1
    m1, mo = n * h * w, n * ho * wo
    conv_shortcut = (stride != 1) or (in_channels != exp_c)

    x_cm = x_cm.astype(jnp.float32)
    # Identity blocks get ONE f32 copy (bf16 cast happens in vregs); conv-shortcut blocks get bf16.
    x_in = x_cm.astype(jnp.bfloat16) if conv_shortcut else x_cm

    w1t = params["w1"].T.astype(jnp.bfloat16)                              # (C, Cin)
    w2cat = jnp.concatenate(
        [params["w2"][kh, kw].T for kh in range(3) for kw in range(3)],
        axis=1).astype(jnp.bfloat16)                                       # (C, 9C), tap order = masks
    w3t = params["w3"].T.astype(jnp.bfloat16)                              # (4C, C)
    masks = jnp.asarray(_make_tap_masks(n, h, w), jnp.float32)             # (9, M1)

    col = lambda v: v.reshape(-1, 1).astype(jnp.float32)

    args = [x_in]
    if stride > 1:
        xs = x_cm.reshape(Cin, n, h, w)[:, :, ::stride, ::stride].reshape(Cin, mo)
        args.append(xs.astype(jnp.bfloat16))
    args += [w1t, w2cat, w3t]
    if conv_shortcut:
        args.append(params["ws"].T.astype(jnp.bfloat16))                   # (4C, Cin)
    args.append(masks)
    if stride > 1:
        args.append(jnp.asarray(_make_col_selector(w, wo, stride), jnp.float32))
    args += [col(params["g1"]), col(params["b1"]),
             col(params["g2"]), col(params["b2"]),
             col(params["g3"]), col(params["b3"])]
    if conv_shortcut:
        args += [col(params["gs"]), col(params["bs"])]

    scratch = [pltpu.VMEM((C, m1 + 2 * (w + 1)), jnp.float32)]             # margin-padded h1
    if stride > 1:
        scratch.append(pltpu.VMEM((C, mo), jnp.float32))                   # subsampled h2 staging

    flops = 2 * C * Cin * m1 + 2 * C * (9 * C) * m1 + 2 * exp_c * C * mo
    if conv_shortcut:
        flops += 2 * exp_c * Cin * mo
    if stride > 1:
        flops += 2 * C * w * wo * (n * ho)
    bytes_accessed = sum(int(np.prod(a.shape)) * int(a.dtype.itemsize) for a in args) \
        + exp_c * mo * 4

    kern = functools.partial(_bottleneck_kernel, n=n, h=h, w=w, ho=ho, wo=wo,
                             stride=stride, conv_shortcut=conv_shortcut)
    return pl.pallas_call(
        kern,
        out_shape=jax.ShapeDtypeStruct((exp_c, mo), jnp.float32),
        in_specs=[pl.BlockSpec(memory_space=_VMEM)] * len(args),
        out_specs=pl.BlockSpec(memory_space=_VMEM),
        scratch_shapes=scratch,
        compiler_params=pltpu.CompilerParams(vmem_limit_bytes=48 * 1024 * 1024),
        cost_estimate=pl.CostEstimate(flops=flops, transcendentals=0,
                                      bytes_accessed=bytes_accessed),
    )(*args)


def bottleneck_forward(x_nchw, params, *, in_channels, out_channels, stride):
    """NCHW wrapper (PyTorch convention).  Relayout only at entry/exit; chain blocks via *_cm."""
    exp_c = out_channels * EXPANSION
    N, Cin, H, W = x_nchw.shape
    Ho = (H + 2 - 3) // stride + 1
    Wo = (W + 2 - 3) // stride + 1
    x_cm = jnp.transpose(x_nchw.astype(jnp.float32), (1, 0, 2, 3)).reshape(Cin, N * H * W)
    out = bottleneck_forward_cm(x_cm, params, n=N, h=H, w=W,
                                in_channels=in_channels, out_channels=out_channels,
                                stride=stride)
    return jnp.transpose(out.reshape(exp_c, N, Ho, Wo), (1, 0, 2, 3))


# ----------------------------------------------------------------------------- parameters

def init_bottleneck_params(key, in_channels, out_channels):
    exp_c = out_channels * EXPANSION
    ks = jax.random.split(key, 12)
    std = 0.1
    return {
        "w1": std * jax.random.normal(ks[0], (in_channels, out_channels), jnp.float32),
        "g1": 1.0 + std * jax.random.normal(ks[1], (out_channels,), jnp.float32),
        "b1": std * jax.random.normal(ks[2], (out_channels,), jnp.float32),
        "w2": std * jax.random.normal(ks[3], (3, 3, out_channels, out_channels), jnp.float32),
        "g2": 1.0 + std * jax.random.normal(ks[4], (out_channels,), jnp.float32),
        "b2": std * jax.random.normal(ks[5], (out_channels,), jnp.float32),
        "w3": std * jax.random.normal(ks[6], (out_channels, exp_c), jnp.float32),
        "g3": 1.0 + std * jax.random.normal(ks[7], (exp_c,), jnp.float32),
        "b3": std * jax.random.normal(ks[8], (exp_c,), jnp.float32),
        "ws": std * jax.random.normal(ks[9], (in_channels, exp_c), jnp.float32),
        "gs": 1.0 + std * jax.random.normal(ks[10], (exp_c,), jnp.float32),
        "bs": std * jax.random.normal(ks[11], (exp_c,), jnp.float32),
    }


# ----------------------------------------------------------------------------- pure-JAX reference

def _ref_bn(y, gamma, beta):
    mean = jnp.mean(y, axis=(0, 1, 2), keepdims=True)
    var = jnp.mean((y - mean) ** 2, axis=(0, 1, 2), keepdims=True)
    return (y - mean) * jax.lax.rsqrt(var + EPS) * gamma + beta


def _ref_conv(x, w, stride, padding):
    return jax.lax.conv_general_dilated(
        x.astype(jnp.bfloat16), w.astype(jnp.bfloat16), (stride, stride), padding,
        dimension_numbers=("NHWC", "HWIO", "NHWC"),
        preferred_element_type=jnp.float32)


def bottleneck_reference(x_nchw, params, *, in_channels, out_channels, stride):
    exp_c = out_channels * EXPANSION
    x = jnp.transpose(x_nchw, (0, 2, 3, 1)).astype(jnp.float32)
    h = jnp.maximum(_ref_bn(_ref_conv(x, params["w1"][None, None], 1, "VALID"),
                            params["g1"], params["b1"]), 0.0)
    h = jnp.maximum(_ref_bn(_ref_conv(h, params["w2"], stride, ((1, 1), (1, 1))),
                            params["g2"], params["b2"]), 0.0)
    if stride != 1 or in_channels != exp_c:
        sc = _ref_bn(_ref_conv(x, params["ws"][None, None], stride, "VALID"),
                     params["gs"], params["bs"])
    else:
        sc = x
    h = _ref_bn(_ref_conv(h, params["w3"][None, None], 1, "VALID"),
                params["g3"], params["b3"])
    return jnp.transpose(jnp.maximum(h + sc, 0.0), (0, 3, 1, 2))


# ----------------------------------------------------------------------------- main

def _run_case(key, n, in_c, out_c, stride, h=16, w=16):
    k_x, k_p = jax.random.split(key)
    x = jax.random.normal(k_x, (n, in_c, h, w), jnp.float32)
    params = init_bottleneck_params(k_p, in_c, out_c)
    out = jax.block_until_ready(
        bottleneck_forward(x, params, in_channels=in_c, out_channels=out_c, stride=stride))
    ho, wo = (h + 2 - 3) // stride + 1, (w + 2 - 3) // stride + 1
    assert out.shape == (n, out_c * EXPANSION, ho, wo), out.shape
    ref = jax.block_until_ready(
        bottleneck_reference(x, params, in_channels=in_c, out_channels=out_c, stride=stride))
    err = float(jnp.max(jnp.abs(out - ref)))
    assert jnp.allclose(out, ref, atol=1e-2, rtol=1e-2), err


if __name__ == "__main__":
    key = jax.random.PRNGKey(0)
    k1, k2, k3 = jax.random.split(key, 3)

    # Case 1: stride-2 block with a conv shortcut (downsampling path).
    _run_case(k1, n=2, in_c=16, out_c=8, stride=2)
    # Case 2: stride-1 block with identity shortcut (in_channels == 4 * out_channels).
    _run_case(k2, n=2, in_c=32, out_c=8, stride=1)
    # Case 3: stride-1 block with a conv shortcut (channel-expanding first block of a stage).
    _run_case(k3, n=2, in_c=16, out_c=8, stride=1)

    print("KERNEL_OK")
</pallas_src>

<mosaic_0001>
module attributes {stable_mosaic.version = 11 : i64} {
  func.func @_bottleneck_kernel(%arg0: memref<16x512xbf16, #tpu.memory_space<vmem>>, %arg1: memref<16x128xbf16, #tpu.memory_space<vmem>>, %arg2: memref<8x16xbf16, #tpu.memory_space<vmem>>, %arg3: memref<8x72xbf16, #tpu.memory_space<vmem>>, %arg4: memref<32x8xbf16, #tpu.memory_space<vmem>>, %arg5: memref<32x16xbf16, #tpu.memory_space<vmem>>, %arg6: memref<9x512xf32, #tpu.memory_space<vmem>>, %arg7: memref<16x8xf32, #tpu.memory_space<vmem>>, %arg8: memref<8x1xf32, #tpu.memory_space<vmem>>, %arg9: memref<8x1xf32, #tpu.memory_space<vmem>>, %arg10: memref<8x1xf32, #tpu.memory_space<vmem>>, %arg11: memref<8x1xf32, #tpu.memory_space<vmem>>, %arg12: memref<32x1xf32, #tpu.memory_space<vmem>>, %arg13: memref<32x1xf32, #tpu.memory_space<vmem>>, %arg14: memref<32x1xf32, #tpu.memory_space<vmem>>, %arg15: memref<32x1xf32, #tpu.memory_space<vmem>>, %arg16: memref<32x128xf32, #tpu.memory_space<vmem>>, %arg17: memref<8x546xf32, #tpu.memory_space<vmem>>, %arg18: memref<8x128xf32, #tpu.memory_space<vmem>>) attributes {dimension_semantics = [], scalar_prefetch = 0 : i64, scratch_operands = 2 : i64, tpu.core_type = #tpu.core_type<tc>} {
    %c0 = arith.constant 0 : index
    %c0_0 = arith.constant 0 : index
    %0 = vector.load %arg0[%c0, %c0_0] : memref<16x512xbf16, #tpu.memory_space<vmem>>, vector<16x512xbf16>
    %c0_1 = arith.constant 0 : index
    %c0_2 = arith.constant 0 : index
    %1 = vector.load %arg2[%c0_1, %c0_2] : memref<8x16xbf16, #tpu.memory_space<vmem>>, vector<8x16xbf16>
    %cst = arith.constant dense<0.000000e+00> : vector<8x512xf32>
    %2 = tpu.matmul %1, %0, %cst {dimension_numbers = #tpu.dot_dimension_numbers<[1], [0], [0], [1], [0, 0, 1, 1], [], []>} : vector<8x16xbf16>, vector<16x512xbf16>, vector<8x512xf32> -> vector<8x512xf32>
    %c0_3 = arith.constant 0 : index
    %c0_4 = arith.constant 0 : index
    %3 = vector.load %arg8[%c0_3, %c0_4] : memref<8x1xf32, #tpu.memory_space<vmem>>, vector<8x1xf32>
    %c0_5 = arith.constant 0 : index
    %c0_6 = arith.constant 0 : index
    %4 = vector.load %arg9[%c0_5, %c0_6] : memref<8x1xf32, #tpu.memory_space<vmem>>, vector<8x1xf32>
    %cst_7 = arith.constant dense<0.000000e+00> : vector<8xf32>
    %5 = vector.multi_reduction <add>, %2, %cst_7 [1] : vector<8x512xf32> to vector<8xf32>
    %6 = vector.shape_cast %5 : vector<8xf32> to vector<8x1xf32>
    %cst_8 = arith.constant 0.001953125 : f32
    %7 = vector.broadcast %cst_8 : f32 to vector<8x1xf32>
    %8 = arith.mulf %6, %7 : vector<8x1xf32>
    %9 = vector.broadcast %8 : vector<8x1xf32> to vector<8x512xf32>
    %10 = arith.subf %2, %9 : vector<8x512xf32>
    %11 = arith.mulf %10, %10 : vector<8x512xf32>
    %cst_9 = arith.constant dense<0.000000e+00> : vector<8xf32>
    %12 = vector.multi_reduction <add>, %11, %cst_9 [1] : vector<8x512xf32> to vector<8xf32>
    %13 = vector.shape_cast %12 : vector<8xf32> to vector<8x1xf32>
    %cst_10 = arith.constant 0.001953125 : f32
    %14 = vector.broadcast %cst_10 : f32 to vector<8x1xf32>
    %15 = arith.mulf %13, %14 : vector<8x1xf32>
    %cst_11 = arith.constant 9.99999974E-6 : f32
    %16 = vector.broadcast %cst_11 : f32 to vector<8x1xf32>
    %17 = arith.addf %15, %16 : vector<8x1xf32>
    %18 = math.rsqrt %17 : vector<8x1xf32>
    %19 = arith.mulf %3, %18 : vector<8x1xf32>
    %20 = arith.mulf %8, %19 : vector<8x1xf32>
    %21 = arith.subf %4, %20 : vector<8x1xf32>
    %22 = vector.broadcast %19 : vector<8x1xf32> to vector<8x512xf32>
    %23 = arith.mulf %2, %22 : vector<8x512xf32>
    %24 = vector.broadcast %21 : vector<8x1xf32> to vector<8x512xf32>
    %25 = arith.addf %23, %24 : vector<8x512xf32>
    %cst_12 = arith.constant 0.000000e+00 : f32
    %26 = vector.broadcast %cst_12 : f32 to vector<8x512xf32>
    %27 = arith.maximumf %25, %26 : vector<8x512xf32>
    %cst_13 = arith.constant 0.000000e+00 : f32
    %28 = vector.broadcast %cst_13 : f32 to vector<8x17xf32>
    %c0_14 = arith.constant 0 : index
    %c0_15 = arith.constant 0 : index
    %29 = vector.load %arg17[%c0_14, %c0_15] : memref<8x546xf32, #tpu.memory_space<vmem>>, vector<8x17xf32>
    tpu.vector_store %arg17[%c0_14, %c0_15], %28 {strides = array<i32>} : memref<8x546xf32, #tpu.memory_space<vmem>>, vector<8x17xf32>,
    %cst_16 = arith.constant 0.000000e+00 : f32
    %30 = vector.broadcast %cst_16 : f32 to vector<8x17xf32>
    %c0_17 = arith.constant 0 : index
    %c529 = arith.constant 529 : index
    %31 = vector.load %arg17[%c0_17, %c529] : memref<8x546xf32, #tpu.memory_space<vmem>>, vector<8x17xf32>
    tpu.vector_store %arg17[%c0_17, %c529], %30 {strides = array<i32>} : memref<8x546xf32, #tpu.memory_space<vmem>>, vector<8x17xf32>,
    %c0_18 = arith.constant 0 : index
    %c17 = arith.constant 17 : index
    %32 = vector.load %arg17[%c0_18, %c17] : memref<8x546xf32, #tpu.memory_space<vmem>>, vector<8x512xf32>
    tpu.vector_store %arg17[%c0_18, %c17], %27 {strides = array<i32>} : memref<8x546xf32, #tpu.memory_space<vmem>>, vector<8x512xf32>,
    %c0_19 = arith.constant 0 : index
    %c0_20 = arith.constant 0 : index
    %33 = vector.load %arg17[%c0_19, %c0_20] : memref<8x546xf32, #tpu.memory_space<vmem>>, vector<8x512xf32>
    %c0_21 = arith.constant 0 : index
    %c0_22 = arith.constant 0 : index
    %34 = vector.load %arg6[%c0_21, %c0_22] : memref<9x512xf32, #tpu.memory_space<vmem>>, vector<1x512xf32>
    %35 = vector.broadcast %34 : vector<1x512xf32> to vector<8x512xf32>
    %36 = arith.mulf %33, %35 : vector<8x512xf32>
    %c0_23 = arith.constant 0 : index
    %c1 = arith.constant 1 : index
    %37 = vector.load %arg17[%c0_23, %c1] : memref<8x546xf32, #tpu.memory_space<vmem>>, vector<8x512xf32>
    %c1_24 = arith.constant 1 : index
    %c0_25 = arith.constant 0 : index
    %38 = vector.load %arg6[%c1_24, %c0_25] : memref<9x512xf32, #tpu.memory_space<vmem>>, vector<1x512xf32>
    %39 = vector.broadcast %38 : vector<1x512xf32> to vector<8x512xf32>
    %40 = arith.mulf %37, %39 : vector<8x512xf32>
    %c0_26 = arith.constant 0 : index
    %c2 = arith.constant 2 : index
    %41 = vector.load %arg17[%c0_26, %c2] : memref<8x546xf32, #tpu.memory_space<vmem>>, vector<8x512xf32>
    %c2_27 = arith.constant 2 : index
    %c0_28 = arith.constant 0 : index
    %42 = vector.load %arg6[%c2_27, %c0_28] : memref<9x512xf32, #tpu.memory_space<vmem>>, vector<1x512xf32>
    %43 = vector.broadcast %42 : vector<1x512xf32> to vector<8x512xf32>
    %44 = arith.mulf %41, %43 : vector<8x512xf32>
    %c0_29 = arith.constant 0 : index
    %c16 = arith.constant 16 : index
    %45 = vector.load %arg17[%c0_29, %c16] : memref<8x546xf32, #tpu.memory_space<vmem>>, vector<8x512xf32>
    %c3 = arith.constant 3 : index
    %c0_30 = arith.constant 0 : index
    %46 = vector.load %arg6[%c3, %c0_30] : memref<9x512xf32, #tpu.memory_space<vmem>>, vector<1x512xf32>
    %47 = vector.broadcast %46 : vector<1x512xf32> to vector<8x512xf32>
    %48 = arith.mulf %45, %47 : vector<8x512xf32>
    %c0_31 = arith.constant 0 : index
    %c17_32 = arith.constant 17 : index
    %49 = vector.load %arg17[%c0_31, %c17_32] : memref<8x546xf32, #tpu.memory_space<vmem>>, vector<8x512xf32>
    %c4 = arith.constant 4 : index
    %c0_33 = arith.constant 0 : index
    %50 = vector.load %arg6[%c4, %c0_33] : memref<9x512xf32, #tpu.memory_space<vmem>>, vector<1x512xf32>
    %51 = vector.broadcast %50 : vector<1x512xf32> to vector<8x512xf32>
    %52 = arith.mulf %49, %51 : vector<8x512xf32>
    %c0_34 = arith.constant 0 : index
    %c18 = arith.constant 18 : index
    %53 = vector.load %arg17[%c0_34, %c18] : memref<8x546xf32, #tpu.memory_space<vmem>>, vector<8x512xf32>
    %c5 = arith.constant 5 : index
    %c0_35 = arith.constant 0 : index
    %54 = vector.load %arg6[%c5, %c0_35] : memref<9x512xf32, #tpu.memory_space<vmem>>, vector<1x512xf32>
    %55 = vector.broadcast %54 : vector<1x512xf32> to vector<8x512xf32>
    %56 = arith.mulf %53, %55 : vector<8x512xf32>
    %c0_36 = arith.constant 0 : index
    %c32 = arith.constant 32 : index
    %57 = vector.load %arg17[%c0_36, %c32] : memref<8x546xf32, #tpu.memory_space<vmem>>, vector<8x512xf32>
    %c6 = arith.constant 6 : index
    %c0_37 = arith.constant 0 : index
    %58 = vector.load %arg6[%c6, %c0_37] : memref<9x512xf32, #tpu.memory_space<vmem>>, vector<1x512xf32>
    %59 = vector.broadcast %58 : vector<1x512xf32> to vector<8x512xf32>
    %60 = arith.mulf %57, %59 : vector<8x512xf32>
    %c0_38 = arith.constant 0 : index
    %c33 = arith.constant 33 : index
    %61 = vector.load %arg17[%c0_38, %c33] : memref<8x546xf32, #tpu.memory_space<vmem>>, vector<8x512xf32>
    %c7 = arith.constant 7 : index
    %c0_39 = arith.constant 0 : index
    %62 = vector.load %arg6[%c7, %c0_39] : memref<9x512xf32, #tpu.memory_space<vmem>>, vector<1x512xf32>
    %63 = vector.broadcast %62 : vector<1x512xf32> to vector<8x512xf32>
    %64 = arith.mulf %61, %63 : vector<8x512xf32>
    %c0_40 = arith.constant 0 : index
    %c34 = arith.constant 34 : index
    %65 = vector.load %arg17[%c0_40, %c34] : memref<8x546xf32, #tpu.memory_space<vmem>>, vector<8x512xf32>
    %c8 = arith.constant 8 : index
    %c0_41 = arith.constant 0 : index
    %66 = vector.load %arg6[%c8, %c0_41] : memref<9x512xf32, #tpu.memory_space<vmem>>, vector<1x512xf32>
    %67 = vector.broadcast %66 : vector<1x512xf32> to vector<8x512xf32>
    %68 = arith.mulf %65, %67 : vector<8x512xf32>
    %69 = tpu.concatenate %36, %40, %44, %48, %52, %56, %60, %64, %68 in 0 : vector<8x512xf32>, vector<8x512xf32>, vector<8x512xf32>, vector<8x512xf32>, vector<8x512xf32>, vector<8x512xf32>, vector<8x512xf32>, vector<8x512xf32>, vector<8x512xf32> -> vector<72x512xf32>
    %70 = arith.truncf %69 : vector<72x512xf32> to vector<72x512xbf16>
    %c0_42 = arith.constant 0 : index
    %c0_43 = arith.constant 0 : index
    %71 = vector.load %arg3[%c0_42, %c0_43] : memref<8x72xbf16, #tpu.memory_space<vmem>>, vector<8x72xbf16>
    %cst_44 = arith.constant dense<0.000000e+00> : vector<8x512xf32>
    %72 = tpu.matmul %71, %70, %cst_44 {dimension_numbers = #tpu.dot_dimension_numbers<[1], [0], [0], [1], [0, 0, 1, 1], [], []>} : vector<8x72xbf16>, vector<72x512xbf16>, vector<8x512xf32> -> vector<8x512xf32>
    %c0_45 = arith.constant 0 : index
    %c0_46 = arith.constant 0 : index
    %73 = vector.load %arg7[%c0_45, %c0_46] : memref<16x8xf32, #tpu.memory_space<vmem>>, vector<16x8xf32>
    %74 = vector.extract_strided_slice %72 {offsets = [0, 0], sizes = [8, 16], strides = [1, 1]} : vector<8x512xf32> to vector<8x16xf32>
    %cst_47 = arith.constant dense<0.000000e+00> : vector<8x8xf32>
    %75 = tpu.matmul %74, %73, %cst_47 {dimension_numbers = #tpu.dot_dimension_numbers<[1], [0], [0], [1], [0, 0, 1, 1], [], []>} : vector<8x16xf32>, vector<16x8xf32>, vector<8x8xf32> -> vector<8x8xf32>
    %c0_48 = arith.constant 0 : index
    %c0_49 = arith.constant 0 : index
    %76 = vector.load %arg18[%c0_48, %c0_49] : memref<8x128xf32, #tpu.memory_space<vmem>>, vector<8x8xf32>
    tpu.vector_store %arg18[%c0_48, %c0_49], %75 {strides = array<i32>} : memref<8x128xf32, #tpu.memory_space<vmem>>, vector<8x8xf32>,
    %77 = vector.extract_strided_slice %72 {offsets = [0, 32], sizes = [8, 16], strides = [1, 1]} : vector<8x512xf32> to vector<8x16xf32>
    %cst_50 = arith.constant dense<0.000000e+00> : vector<8x8xf32>
    %78 = tpu.matmul %77, %73, %cst_50 {dimension_numbers = #tpu.dot_dimension_numbers<[1], [0], [0], [1], [0, 0, 1, 1], [], []>} : vector<8x16xf32>, vector<16x8xf32>, vector<8x8xf32> -> vector<8x8xf32>
    %c0_51 = arith.constant 0 : index
    %c8_52 = arith.constant 8 : index
    %79 = vector.load %arg18[%c0_51, %c8_52] : memref<8x128xf32, #tpu.memory_space<vmem>>, vector<8x8xf32>
    tpu.vector_store %arg18[%c0_51, %c8_52], %78 {strides = array<i32>} : memref<8x128xf32, #tpu.memory_space<vmem>>, vector<8x8xf32>,
    %80 = vector.extract_strided_slice %72 {offsets = [0, 64], sizes = [8, 16], strides = [1, 1]} : vector<8x512xf32> to vector<8x16xf32>
    %cst_53 = arith.constant dense<0.000000e+00> : vector<8x8xf32>
    %81 = tpu.matmul %80, %73, %cst_53 {dimension_numbers = #tpu.dot_dimension_numbers<[1], [0], [0], [1], [0, 0, 1, 1], [], []>} : vector<8x16xf32>, vector<16x8xf32>, vector<8x8xf32> -> vector<8x8xf32>
    %c0_54 = arith.constant 0 : index
    %c16_55 = arith.constant 16 : index
    %82 = vector.load %arg18[%c0_54, %c16_55] : memref<8x128xf32, #tpu.memory_space<vmem>>, vector<8x8xf32>
    tpu.vector_store %arg18[%c0_54, %c16_55], %81 {strides = array<i32>} : memref<8x128xf32, #tpu.memory_space<vmem>>, vector<8x8xf32>,
    %83 = vector.extract_strided_slice %72 {offsets = [0, 96], sizes = [8, 16], strides = [1, 1]} : vector<8x512xf32> to vector<8x16xf32>
    %cst_56 = arith.constant dense<0.000000e+00> : vector<8x8xf32>
    %84 = tpu.matmul %83, %73, %cst_56 {dimension_numbers = #tpu.dot_dimension_numbers<[1], [0], [0], [1], [0, 0, 1, 1], [], []>} : vector<8x16xf32>, vector<16x8xf32>, vector<8x8xf32> -> vector<8x8xf32>
    %c0_57 = arith.constant 0 : index
    %c24 = arith.constant 24 : index
    %85 = vector.load %arg18[%c0_57, %c24] : memref<8x128xf32, #tpu.memory_space<vmem>>, vector<8x8xf32>
    tpu.vector_store %arg18[%c0_57, %c24], %84 {strides = array<i32>} : memref<8x128xf32, #tpu.memory_space<vmem>>, vector<8x8xf32>,
    %86 = vector.extract_strided_slice %72 {offsets = [0, 128], sizes = [8, 16], strides = [1, 1]} : vector<8x512xf32> to vector<8x16xf32>
    %cst_58 = arith.constant dense<0.000000e+00> : vector<8x8xf32>
    %87 = tpu.matmul %86, %73, %cst_58 {dimension_numbers = #tpu.dot_dimension_numbers<[1], [0], [0], [1], [0, 0, 1, 1], [], []>} : vector<8x16xf32>, vector<16x8xf32>, vector<8x8xf32> -> vector<8x8xf32>
    %c0_59 = arith.constant 0 : index
    %c32_60 = arith.constant 32 : index
    %88 = vector.load %arg18[%c0_59, %c32_60] : memref<8x128xf32, #tpu.memory_space<vmem>>, vector<8x8xf32>
    tpu.vector_store %arg18[%c0_59, %c32_60], %87 {strides = array<i32>} : memref<8x128xf32, #tpu.memory_space<vmem>>, vector<8x8xf32>,
    %89 = vector.extract_strided_slice %72 {offsets = [0, 160], sizes = [8, 16], strides = [1, 1]} : vector<8x512xf32> to vector<8x16xf32>
    %cst_61 = arith.constant dense<0.000000e+00> : vector<8x8xf32>
    %90 = tpu.matmul %89, %73, %cst_61 {dimension_numbers = #tpu.dot_dimension_numbers<[1], [0], [0], [1], [0, 0, 1, 1], [], []>} : vector<8x16xf32>, vector<16x8xf32>, vector<8x8xf32> -> vector<8x8xf32>
    %c0_62 = arith.constant 0 : index
    %c40 = arith.constant 40 : index
    %91 = vector.load %arg18[%c0_62, %c40] : memref<8x128xf32, #tpu.memory_space<vmem>>, vector<8x8xf32>
    tpu.vector_store %arg18[%c0_62, %c40], %90 {strides = array<i32>} : memref<8x128xf32, #tpu.memory_space<vmem>>, vector<8x8xf32>,
    %92 = vector.extract_strided_slice %72 {offsets = [0, 192], sizes = [8, 16], strides = [1, 1]} : vector<8x512xf32> to vector<8x16xf32>
    %cst_63 = arith.constant dense<0.000000e+00> : vector<8x8xf32>
    %93 = tpu.matmul %92, %73, %cst_63 {dimension_numbers = #tpu.dot_dimension_numbers<[1], [0], [0], [1], [0, 0, 1, 1], [], []>} : vector<8x16xf32>, vector<16x8xf32>, vector<8x8xf32> -> vector<8x8xf32>
    %c0_64 = arith.constant 0 : index
    %c48 = arith.constant 48 : index
    %94 = vector.load %arg18[%c0_64, %c48] : memref<8x128xf32, #tpu.memory_space<vmem>>, vector<8x8xf32>
    tpu.vector_store %arg18[%c0_64, %c48], %93 {strides = array<i32>} : memref<8x128xf32, #tpu.memory_space<vmem>>, vector<8x8xf32>,
    %95 = vector.extract_strided_slice %72 {offsets = [0, 224], sizes = [8, 16], strides = [1, 1]} : vector<8x512xf32> to vector<8x16xf32>
    %cst_65 = arith.constant dense<0.000000e+00> : vector<8x8xf32>
    %96 = tpu.matmul %95, %73, %cst_65 {dimension_numbers = #tpu.dot_dimension_numbers<[1], [0], [0], [1], [0, 0, 1, 1], [], []>} : vector<8x16xf32>, vector<16x8xf32>, vector<8x8xf32> -> vector<8x8xf32>
    %c0_66 = arith.constant 0 : index
    %c56 = arith.constant 56 : index
    %97 = vector.load %arg18[%c0_66, %c56] : memref<8x128xf32, #tpu.memory_space<vmem>>, vector<8x8xf32>
    tpu.vector_store %arg18[%c0_66, %c56], %96 {strides = array<i32>} : memref<8x128xf32, #tpu.memory_space<vmem>>, vector<8x8xf32>,
    %98 = vector.extract_strided_slice %72 {offsets = [0, 256], sizes = [8, 16], strides = [1, 1]} : vector<8x512xf32> to vector<8x16xf32>
    %cst_67 = arith.constant dense<0.000000e+00> : vector<8x8xf32>
    %99 = tpu.matmul %98, %73, %cst_67 {dimension_numbers = #tpu.dot_dimension_numbers<[1], [0], [0], [1], [0, 0, 1, 1], [], []>} : vector<8x16xf32>, vector<16x8xf32>, vector<8x8xf32> -> vector<8x8xf32>
    %c0_68 = arith.constant 0 : index
    %c64 = arith.constant 64 : index
    %100 = vector.load %arg18[%c0_68, %c64] : memref<8x128xf32, #tpu.memory_space<vmem>>, vector<8x8xf32>
    tpu.vector_store %arg18[%c0_68, %c64], %99 {strides = array<i32>} : memref<8x128xf32, #tpu.memory_space<vmem>>, vector<8x8xf32>,
    %101 = vector.extract_strided_slice %72 {offsets = [0, 288], sizes = [8, 16], strides = [1, 1]} : vector<8x512xf32> to vector<8x16xf32>
    %cst_69 = arith.constant dense<0.000000e+00> : vector<8x8xf32>
    %102 = tpu.matmul %101, %73, %cst_69 {dimension_numbers = #tpu.dot_dimension_numbers<[1], [0], [0], [1], [0, 0, 1, 1], [], []>} : vector<8x16xf32>, vector<16x8xf32>, vector<8x8xf32> -> vector<8x8xf32>
    %c0_70 = arith.constant 0 : index
    %c72 = arith.constant 72 : index
    %103 = vector.load %arg18[%c0_70, %c72] : memref<8x128xf32, #tpu.memory_space<vmem>>, vector<8x8xf32>
    tpu.vector_store %arg18[%c0_70, %c72], %102 {strides = array<i32>} : memref<8x128xf32, #tpu.memory_space<vmem>>, vector<8x8xf32>,
    %104 = vector.extract_strided_slice %72 {offsets = [0, 320], sizes = [8, 16], strides = [1, 1]} : vector<8x512xf32> to vector<8x16xf32>
    %cst_71 = arith.constant dense<0.000000e+00> : vector<8x8xf32>
    %105 = tpu.matmul %104, %73, %cst_71 {dimension_numbers = #tpu.dot_dimension_numbers<[1], [0], [0], [1], [0, 0, 1, 1], [], []>} : vector<8x16xf32>, vector<16x8xf32>, vector<8x8xf32> -> vector<8x8xf32>
    %c0_72 = arith.constant 0 : index
    %c80 = arith.constant 80 : index
    %106 = vector.load %arg18[%c0_72, %c80] : memref<8x128xf32, #tpu.memory_space<vmem>>, vector<8x8xf32>
    tpu.vector_store %arg18[%c0_72, %c80], %105 {strides = array<i32>} : memref<8x128xf32, #tpu.memory_space<vmem>>, vector<8x8xf32>,
    %107 = vector.extract_strided_slice %72 {offsets = [0, 352], sizes = [8, 16], strides = [1, 1]} : vector<8x512xf32> to vector<8x16xf32>
    %cst_73 = arith.constant dense<0.000000e+00> : vector<8x8xf32>
    %108 = tpu.matmul %107, %73, %cst_73 {dimension_numbers = #tpu.dot_dimension_numbers<[1], [0], [0], [1], [0, 0, 1, 1], [], []>} : vector<8x16xf32>, vector<16x8xf32>, vector<8x8xf32> -> vector<8x8xf32>
    %c0_74 = arith.constant 0 : index
    %c88 = arith.constant 88 : index
    %109 = vector.load %arg18[%c0_74, %c88] : memref<8x128xf32, #tpu.memory_space<vmem>>, vector<8x8xf32>
    tpu.vector_store %arg18[%c0_74, %c88], %108 {strides = array<i32>} : memref<8x128xf32, #tpu.memory_space<vmem>>, vector<8x8xf32>,
    %110 = vector.extract_strided_slice %72 {offsets = [0, 384], sizes = [8, 16], strides = [1, 1]} : vector<8x512xf32> to vector<8x16xf32>
    %cst_75 = arith.constant dense<0.000000e+00> : vector<8x8xf32>
    %111 = tpu.matmul %110, %73, %cst_75 {dimension_numbers = #tpu.dot_dimension_numbers<[1], [0], [0], [1], [0, 0, 1, 1], [], []>} : vector<8x16xf32>, vector<16x8xf32>, vector<8x8xf32> -> vector<8x8xf32>
    %c0_76 = arith.constant 0 : index
    %c96 = arith.constant 96 : index
    %112 = vector.load %arg18[%c0_76, %c96] : memref<8x128xf32, #tpu.memory_space<vmem>>, vector<8x8xf32>
    tpu.vector_store %arg18[%c0_76, %c96], %111 {strides = array<i32>} : memref<8x128xf32, #tpu.memory_space<vmem>>, vector<8x8xf32>,
    %113 = vector.extract_strided_slice %72 {offsets = [0, 416], sizes = [8, 16], strides = [1, 1]} : vector<8x512xf32> to vector<8x16xf32>
    %cst_77 = arith.constant dense<0.000000e+00> : vector<8x8xf32>
    %114 = tpu.matmul %113, %73, %cst_77 {dimension_numbers = #tpu.dot_dimension_numbers<[1], [0], [0], [1], [0, 0, 1, 1], [], []>} : vector<8x16xf32>, vector<16x8xf32>, vector<8x8xf32> -> vector<8x8xf32>
    %c0_78 = arith.constant 0 : index
    %c104 = arith.constant 104 : index
    %115 = vector.load %arg18[%c0_78, %c104] : memref<8x128xf32, #tpu.memory_space<vmem>>, vector<8x8xf32>
    tpu.vector_store %arg18[%c0_78, %c104], %114 {strides = array<i32>} : memref<8x128xf32, #tpu.memory_space<vmem>>, vector<8x8xf32>,
    %116 = vector.extract_strided_slice %72 {offsets = [0, 448], sizes = [8, 16], strides = [1, 1]} : vector<8x512xf32> to vector<8x16xf32>
    %cst_79 = arith.constant dense<0.000000e+00> : vector<8x8xf32>
    %117 = tpu.matmul %116, %73, %cst_79 {dimension_numbers = #tpu.dot_dimension_numbers<[1], [0], [0], [1], [0, 0, 1, 1], [], []>} : vector<8x16xf32>, vector<16x8xf32>, vector<8x8xf32> -> vector<8x8xf32>
    %c0_80 = arith.constant 0 : index
    %c112 = arith.constant 112 : index
    %118 = vector.load %arg18[%c0_80, %c112] : memref<8x128xf32, #tpu.memory_space<vmem>>, vector<8x8xf32>
    tpu.vector_store %arg18[%c0_80, %c112], %117 {strides = array<i32>} : memref<8x128xf32, #tpu.memory_space<vmem>>, vector<8x8xf32>,
    %119 = vector.extract_strided_slice %72 {offsets = [0, 480], sizes = [8, 16], strides = [1, 1]} : vector<8x512xf32> to vector<8x16xf32>
    %cst_81 = arith.constant dense<0.000000e+00> : vector<8x8xf32>
    %120 = tpu.matmul %119, %73, %cst_81 {dimension_numbers = #tpu.dot_dimension_numbers<[1], [0], [0], [1], [0, 0, 1, 1], [], []>} : vector<8x16xf32>, vector<16x8xf32>, vector<8x8xf32> -> vector<8x8xf32>
    %c0_82 = arith.constant 0 : index
    %c120 = arith.constant 120 : index
    %121 = vector.load %arg18[%c0_82, %c120] : memref<8x128xf32, #tpu.memory_space<vmem>>, vector<8x8xf32>
    tpu.vector_store %arg18[%c0_82, %c120], %120 {strides = array<i32>} : memref<8x128xf32, #tpu.memory_space<vmem>>, vector<8x8xf32>,
    %c0_83 = arith.constant 0 : index
    %c0_84 = arith.constant 0 : index
    %122 = vector.load %arg18[%c0_83, %c0_84] : memref<8x128xf32, #tpu.memory_space<vmem>>, vector<8x128xf32>
    %c0_85 = arith.constant 0 : index
    %c0_86 = arith.constant 0 : index
    %123 = vector.load %arg10[%c0_85, %c0_86] : memref<8x1xf32, #tpu.memory_space<vmem>>, vector<8x1xf32>
    %c0_87 = arith.constant 0 : index
    %c0_88 = arith.constant 0 : index
    %124 = vector.load %arg11[%c0_87, %c0_88] : memref<8x1xf32, #tpu.memory_space<vmem>>, vector<8x1xf32>
    %cst_89 = arith.constant dense<0.000000e+00> : vector<8xf32>
    %125 = vector.multi_reduction <add>, %122, %cst_89 [1] : vector<8x128xf32> to vector<8xf32>
    %126 = vector.shape_cast %125 : vector<8xf32> to vector<8x1xf32>
    %cst_90 = arith.constant 7.812500e-03 : f32
    %127 = vector.broadcast %cst_90 : f32 to vector<8x1xf32>
    %128 = arith.mulf %126, %127 : vector<8x1xf32>
    %129 = vector.broadcast %128 : vector<8x1xf32> to vector<8x128xf32>
    %130 = arith.subf %122, %129 : vector<8x128xf32>
    %131 = arith.mulf %130, %130 : vector<8x128xf32>
    %cst_91 = arith.constant dense<0.000000e+00> : vector<8xf32>
    %132 = vector.multi_reduction <add>, %131, %cst_91 [1] : vector<8x128xf32> to vector<8xf32>
    %133 = vector.shape_cast %132 : vector<8xf32> to vector<8x1xf32>
    %cst_92 = arith.constant 7.812500e-03 : f32
    %134 = vector.broadcast %cst_92 : f32 to vector<8x1xf32>
    %135 = arith.mulf %133, %134 : vector<8x1xf32>
    %cst_93 = arith.constant 9.99999974E-6 : f32
    %136 = vector.broadcast %cst_93 : f32 to vector<8x1xf32>
    %137 = arith.addf %135, %136 : vector<8x1xf32>
    %138 = math.rsqrt %137 : vector<8x1xf32>
    %139 = arith.mulf %123, %138 : vector<8x1xf32>
    %140 = arith.mulf %128, %139 : vector<8x1xf32>
    %141 = arith.subf %124, %140 : vector<8x1xf32>
    %142 = vector.broadcast %139 : vector<8x1xf32> to vector<8x128xf32>
    %143 = arith.mulf %122, %142 : vector<8x128xf32>
    %144 = vector.broadcast %141 : vector<8x1xf32> to vector<8x128xf32>
    %145 = arith.addf %143, %144 : vector<8x128xf32>
    %cst_94 = arith.constant 0.000000e+00 : f32
    %146 = vector.broadcast %cst_94 : f32 to vector<8x128xf32>
    %147 = arith.maximumf %145, %146 : vector<8x128xf32>
    %c0_95 = arith.constant 0 : index
    %c0_96 = arith.constant 0 : index
    %148 = vector.load %arg4[%c0_95, %c0_96] : memref<32x8xbf16, #tpu.memory_space<vmem>>, vector<32x8xbf16>
    %149 = arith.truncf %147 : vector<8x128xf32> to vector<8x128xbf16>
    %cst_97 = arith.constant dense<0.000000e+00> : vector<32x128xf32>
    %150 = tpu.matmul %148, %149, %cst_97 {dimension_numbers = #tpu.dot_dimension_numbers<[1], [0], [0], [1], [0, 0, 1, 1], [], []>} : vector<32x8xbf16>, vector<8x128xbf16>, vector<32x128xf32> -> vector<32x128xf32>
    %c0_98 = arith.constant 0 : index
    %c0_99 = arith.constant 0 : index
    %151 = vector.load %arg12[%c0_98, %c0_99] : memref<32x1xf32, #tpu.memory_space<vmem>>, vector<32x1xf32>
    %c0_100 = arith.constant 0 : index
    %c0_101 = arith.constant 0 : index
    %152 = vector.load %arg13[%c0_100, %c0_101] : memref<32x1xf32, #tpu.memory_space<vmem>>, vector<32x1xf32>
    %cst_102 = arith.constant dense<0.000000e+00> : vector<32xf32>
    %153 = vector.multi_reduction <add>, %150, %cst_102 [1] : vector<32x128xf32> to vector<32xf32>
    %154 = vector.shape_cast %153 : vector<32xf32> to vector<32x1xf32>
    %cst_103 = arith.constant 7.812500e-03 : f32
    %155 = vector.broadcast %cst_103 : f32 to vector<32x1xf32>
    %156 = arith.mulf %154, %155 : vector<32x1xf32>
    %157 = vector.broadcast %156 : vector<32x1xf32> to vector<32x128xf32>
    %158 = arith.subf %150, %157 : vector<32x128xf32>
    %159 = arith.mulf %158, %158 : vector<32x128xf32>
    %cst_104 = arith.constant dense<0.000000e+00> : vector<32xf32>
    %160 = vector.multi_reduction <add>, %159, %cst_104 [1] : vector<32x128xf32> to vector<32xf32>
    %161 = vector.shape_cast %160 : vector<32xf32> to vector<32x1xf32>
    %cst_105 = arith.constant 7.812500e-03 : f32
    %162 = vector.broadcast %cst_105 : f32 to vector<32x1xf32>
    %163 = arith.mulf %161, %162 : vector<32x1xf32>
    %cst_106 = arith.constant 9.99999974E-6 : f32
    %164 = vector.broadcast %cst_106 : f32 to vector<32x1xf32>
    %165 = arith.addf %163, %164 : vector<32x1xf32>
    %166 = math.rsqrt %165 : vector<32x1xf32>
    %167 = arith.mulf %151, %166 : vector<32x1xf32>
    %168 = arith.mulf %156, %167 : vector<32x1xf32>
    %169 = arith.subf %152, %168 : vector<32x1xf32>
    %170 = vector.broadcast %167 : vector<32x1xf32> to vector<32x128xf32>
    %171 = arith.mulf %150, %170 : vector<32x128xf32>
    %172 = vector.broadcast %169 : vector<32x1xf32> to vector<32x128xf32>
    %173 = arith.addf %171, %172 : vector<32x128xf32>
    %c0_107 = arith.constant 0 : index
    %c0_108 = arith.constant 0 : index
    %174 = vector.load %arg1[%c0_107, %c0_108] : memref<16x128xbf16, #tpu.memory_space<vmem>>, vector<16x128xbf16>
    %c0_109 = arith.constant 0 : index
    %c0_110 = arith.constant 0 : index
    %175 = vector.load %arg5[%c0_109, %c0_110] : memref<32x16xbf16, #tpu.memory_space<vmem>>, vector<32x16xbf16>
    %cst_111 = arith.constant dense<0.000000e+00> : vector<32x128xf32>
    %176 = tpu.matmul %175, %174, %cst_111 {dimension_numbers = #tpu.dot_dimension_numbers<[1], [0], [0], [1], [0, 0, 1, 1], [], []>} : vector<32x16xbf16>, vector<16x128xbf16>, vector<32x128xf32> -> vector<32x128xf32>
    %c0_112 = arith.constant 0 : index
    %c0_113 = arith.constant 0 : index
    %177 = vector.load %arg14[%c0_112, %c0_113] : memref<32x1xf32, #tpu.memory_space<vmem>>, vector<32x1xf32>
    %c0_114 = arith.constant 0 : index
    %c0_115 = arith.constant 0 : index
    %178 = vector.load %arg15[%c0_114, %c0_115] : memref<32x1xf32, #tpu.memory_space<vmem>>, vector<32x1xf32>
    %cst_116 = arith.constant dense<0.000000e+00> : vector<32xf32>
    %179 = vector.multi_reduction <add>, %176, %cst_116 [1] : vector<32x128xf32> to vector<32xf32>
    %180 = vector.shape_cast %179 : vector<32xf32> to vector<32x1xf32>
    %cst_117 = arith.constant 7.812500e-03 : f32
    %181 = vector.broadcast %cst_117 : f32 to vector<32x1xf32>
    %182 = arith.mulf %180, %181 : vector<32x1xf32>
    %183 = vector.broadcast %182 : vector<32x1xf32> to vector<32x128xf32>
    %184 = arith.subf %176, %183 : vector<32x128xf32>
    %185 = arith.mulf %184, %184 : vector<32x128xf32>
    %cst_118 = arith.constant dense<0.000000e+00> : vector<32xf32>
    %186 = vector.multi_reduction <add>, %185, %cst_118 [1] : vector<32x128xf32> to vector<32xf32>
    %187 = vector.shape_cast %186 : vector<32xf32> to vector<32x1xf32>
    %cst_119 = arith.constant 7.812500e-03 : f32
    %188 = vector.broadcast %cst_119 : f32 to vector<32x1xf32>
    %189 = arith.mulf %187, %188 : vector<32x1xf32>
    %cst_120 = arith.constant 9.99999974E-6 : f32
    %190 = vector.broadcast %cst_120 : f32 to vector<32x1xf32>
    %191 = arith.addf %189, %190 : vector<32x1xf32>
    %192 = math.rsqrt %191 : vector<32x1xf32>
    %193 = arith.mulf %177, %192 : vector<32x1xf32>
    %194 = arith.mulf %182, %193 : vector<32x1xf32>
    %195 = arith.subf %178, %194 : vector<32x1xf32>
    %196 = vector.broadcast %193 : vector<32x1xf32> to vector<32x128xf32>
    %197 = arith.mulf %176, %196 : vector<32x128xf32>
    %198 = vector.broadcast %195 : vector<32x1xf32> to vector<32x128xf32>
    %199 = arith.addf %197, %198 : vector<32x128xf32>
    %200 = arith.addf %173, %199 : vector<32x128xf32>
    %cst_121 = arith.constant 0.000000e+00 : f32
    %201 = vector.broadcast %cst_121 : f32 to vector<32x128xf32>
    %202 = arith.maximumf %200, %201 : vector<32x128xf32>
    %c0_122 = arith.constant 0 : index
    %c0_123 = arith.constant 0 : index
    %203 = vector.load %arg16[%c0_122, %c0_123] : memref<32x128xf32, #tpu.memory_space<vmem>>, vector<32x128xf32>
    tpu.vector_store %arg16[%c0_122, %c0_123], %202 {strides = array<i32>} : memref<32x128xf32, #tpu.memory_space<vmem>>, vector<32x128xf32>,
    return
  }
}

</mosaic_0001>

<llo_original>
// kernel: tpu_custom_call.1
$region0: #{tpu_custom_call.1}
  #allocation0 [shape = 'u32[]', space=smem, size = 0x4, offset = 0x4, fixed_abs, tag = 'smem constant byte address 0x4 - core index']
  #allocation1 [shape = 'u32[144,128]{1,0:T(1,128)}', space=vmem, size = 0x12000, scoped, tag = 'internal scratch']
  #allocation2 [shape = 'f32[8,546]{1,0:T(8,128)}', space=vmem, size = 0x5000, scoped, tag = 'scratch operand']
  #allocation3 [shape = 'f32[8,128]{1,0:T(8,128)}', space=vmem, size = 0x1000, scoped, tag = 'scratch operand']
  %s0 = inlined_call_operand.vmem [shape: bf16[16,512], index: 0, kind: input, shape index: {}]
  %s1 = inlined_call_operand.vmem [shape: bf16[16,128], index: 1, kind: input, shape index: {}]
  %s2 = inlined_call_operand.vmem [shape: bf16[8,16], index: 2, kind: input, shape index: {}]
  %s3 = inlined_call_operand.vmem [shape: bf16[8,72], index: 3, kind: input, shape index: {}]
  %s4 = inlined_call_operand.vmem [shape: bf16[32,8], index: 4, kind: input, shape index: {}]
  %s5 = inlined_call_operand.vmem [shape: bf16[32,16], index: 5, kind: input, shape index: {}]
  %s6 = inlined_call_operand.vmem [shape: f32[9,512], index: 6, kind: input, shape index: {}]
  %s7 = inlined_call_operand.vmem [shape: f32[16,8], index: 7, kind: input, shape index: {}]
  %s8 = inlined_call_operand.vmem [shape: f32[8,1], index: 8, kind: input, shape index: {}]
  %s9 = inlined_call_operand.vmem [shape: f32[8,1], index: 9, kind: input, shape index: {}]
  %s10 = inlined_call_operand.vmem [shape: f32[8,1], index: 10, kind: input, shape index: {}]
  %s11 = inlined_call_operand.vmem [shape: f32[8,1], index: 11, kind: input, shape index: {}]
  %s12 = inlined_call_operand.vmem [shape: f32[32,1], index: 12, kind: input, shape index: {}]
  %s13 = inlined_call_operand.vmem [shape: f32[32,1], index: 13, kind: input, shape index: {}]
  %s14 = inlined_call_operand.vmem [shape: f32[32,1], index: 14, kind: input, shape index: {}]
  %s15 = inlined_call_operand.vmem [shape: f32[32,1], index: 15, kind: input, shape index: {}]
  %s16 = inlined_call_operand.hbm [shape: f32[32,128], index: 16, kind: output, shape index: {}]
  %s17 = sld [smem:[#allocation0]]
  $region74: #{tpu_custom_call.1} parent=0
    _
  %s19 = ssub.s32 1, %s17
  %s20 = scalar_select 0, %s19, %s17
  $region1: #{tpu_custom_call.1} parent=0
    #allocation4 [shape = 'u8[16384]{0}', space=vmem, size = 0x4000, scoped, tag = 'output window, operand 0, single buffered']
    #allocation5 [shape = 's32[1]{0}', space=sflag, size = 0x4, scoped, tag = 'scoped memory for tpu_custom_call.1']
    %21 = vsyncpa [#allocation5], 0
    // Predicated region
    $region2: #{tpu_custom_call.1} parent=1 // pred_check
      _
    $region3: #{tpu_custom_call.1} parent=1 // pred_check_branch
      %23 = sbr.rel (0) target = $region5
    $region4: #{tpu_custom_call.1} parent=1 // pred_region
      _
    $region5: #{tpu_custom_call.1} parent=1 // pred_fallthru
      _
    // Predicated region
    $region6: #{tpu_custom_call.1} parent=1 // pred_check
      _
    $region7: #{tpu_custom_call.1} parent=1 // pred_check_branch
      %25 = sbr.rel (0) target = $region9
    $region8: #{tpu_custom_call.1} parent=1 // pred_region
      _
    $region9: #{tpu_custom_call.1} parent=1 // pred_fallthru
      _
    // Predicated region
    $region10: #{tpu_custom_call.1} parent=1 // pred_check
      _
    $region11: #{tpu_custom_call.1} parent=1 // pred_check_branch
      %27 = sbr.rel (0) target = $region13
    $region12: #{tpu_custom_call.1} parent=1 // pred_region
      _
    $region13: #{tpu_custom_call.1} parent=1 // pred_fallthru
      _
    // Predicated region
    $region14: #{tpu_custom_call.1} parent=1 // pred_check
      _
    $region15: #{tpu_custom_call.1} parent=1 // pred_check_branch
      %29 = sbr.rel (0) target = $region17
    $region16: #{tpu_custom_call.1} parent=1 // pred_region
      _
    $region17: #{tpu_custom_call.1} parent=1 // pred_fallthru
      _
    // Predicated region
    $region18: #{tpu_custom_call.1} parent=1 // pred_check
      _
    $region19: #{tpu_custom_call.1} parent=1 // pred_check_branch
      %31 = sbr.rel (0) target = $region21
    $region20: #{tpu_custom_call.1} parent=1 // pred_region
      _
    $region21: #{tpu_custom_call.1} parent=1 // pred_fallthru
      _
    // Predicated region
    $region22: #{tpu_custom_call.1} parent=1 // pred_check
      _
    $region23: #{tpu_custom_call.1} parent=1 // pred_check_branch
      %33 = sbr.rel (0) target = $region25
    $region24: #{tpu_custom_call.1} parent=1 // pred_region
      _
    $region25: #{tpu_custom_call.1} parent=1 // pred_fallthru
      _
    // Predicated region
    $region26: #{tpu_custom_call.1} parent=1 // pred_check
      _
    $region27: #{tpu_custom_call.1} parent=1 // pred_check_branch
      %35 = sbr.rel (0) target = $region29
    $region28: #{tpu_custom_call.1} parent=1 // pred_region
      _
    $region29: #{tpu_custom_call.1} parent=1 // pred_fallthru
      _
    // Predicated region
    $region30: #{tpu_custom_call.1} parent=1 // pred_check
      _
    $region31: #{tpu_custom_call.1} parent=1 // pred_check_branch
      %37 = sbr.rel (0) target = $region33
    $region32: #{tpu_custom_call.1} parent=1 // pred_region
      _
    $region33: #{tpu_custom_call.1} parent=1 // pred_fallthru
      _
    // Predicated region
    $region34: #{tpu_custom_call.1} parent=1 // pred_check
      _
    $region35: #{tpu_custom_call.1} parent=1 // pred_check_branch
      %39 = sbr.rel (0) target = $region37
    $region36: #{tpu_custom_call.1} parent=1 // pred_region
      _
    $region37: #{tpu_custom_call.1} parent=1 // pred_fallthru
      _
    // Predicated region
    $region38: #{tpu_custom_call.1} parent=1 // pred_check
      _
    $region39: #{tpu_custom_call.1} parent=1 // pred_check_branch
      %41 = sbr.rel (0) target = $region41
    $region40: #{tpu_custom_call.1} parent=1 // pred_region
      _
    $region41: #{tpu_custom_call.1} parent=1 // pred_fallthru
      _
    // Predicated region
    $region42: #{tpu_custom_call.1} parent=1 // pred_check
      _
    $region43: #{tpu_custom_call.1} parent=1 // pred_check_branch
      %43 = sbr.rel (0) target = $region45
    $region44: #{tpu_custom_call.1} parent=1 // pred_region
      _
    $region45: #{tpu_custom_call.1} parent=1 // pred_fallthru
      _
    // Predicated region
    $region46: #{tpu_custom_call.1} parent=1 // pred_check
      _
    $region47: #{tpu_custom_call.1} parent=1 // pred_check_branch
      %45 = sbr.rel (0) target = $region49
    $region48: #{tpu_custom_call.1} parent=1 // pred_region
      _
    $region49: #{tpu_custom_call.1} parent=1 // pred_fallthru
      _
    // Predicated region
    $region50: #{tpu_custom_call.1} parent=1 // pred_check
      _
    $region51: #{tpu_custom_call.1} parent=1 // pred_check_branch
      %47 = sbr.rel (0) target = $region53
    $region52: #{tpu_custom_call.1} parent=1 // pred_region
      _
    $region53: #{tpu_custom_call.1} parent=1 // pred_fallthru
      _
    // Predicated region
    $region54: #{tpu_custom_call.1} parent=1 // pred_check
      _
    $region55: #{tpu_custom_call.1} parent=1 // pred_check_branch
      %49 = sbr.rel (0) target = $region57
    $region56: #{tpu_custom_call.1} parent=1 // pred_region
      _
    $region57: #{tpu_custom_call.1} parent=1 // pred_fallthru
      _
    // Predicated region
    $region58: #{tpu_custom_call.1} parent=1 // pred_check
      _
    $region59: #{tpu_custom_call.1} parent=1 // pred_check_branch
      %51 = sbr.rel (0) target = $region61
    $region60: #{tpu_custom_call.1} parent=1 // pred_region
      _
    $region61: #{tpu_custom_call.1} parent=1 // pred_fallthru
      _
    // Predicated region
    $region62: #{tpu_custom_call.1} parent=1 // pred_check
      _
    $region63: #{tpu_custom_call.1} parent=1 // pred_check_branch
      %53 = sbr.rel (0) target = $region65
    $region64: #{tpu_custom_call.1} parent=1 // pred_region
      _
    $region65: #{tpu_custom_call.1} parent=1 // pred_fallthru
      _
    %v55 = vld [vmem:[%s0] sm:$0xff]
    %v56 = vld [vmem:[%s0 + $0x8] sm:$0xff]
    %v57 = vld [vmem:[%s0 + $0x10] sm:$0xff]
    %v58 = vld [vmem:[%s0 + $0x18] sm:$0xff]
    %v59 = vld [vmem:[%s2] sm:$0xf]
    %v64 = vunpack.c.l.b16 %v55
    %v65 = vunpack.c.h.b16 %v55
    %v66 = vunpack.c.l.b16 %v56
    %v67 = vunpack.c.h.b16 %v56
    %v68 = vunpack.c.l.b16 %v57
    %v69 = vunpack.c.h.b16 %v57
    %v70 = vunpack.c.l.b16 %v58
    %v71 = vunpack.c.h.b16 %v58
    %v72 = vpack.c.b16 %v68, %v64
    %v73 = vpack.c.b16 %v69, %v65
    %v74 = vpack.c.b16 %v70, %v66
    %v75 = vpack.c.b16 %v71, %v67
    %vm80 = vcmask 130048
    %v82 = vsel %vm80, %v59, 0
    %84 = vmatprep.subr.bf16.mxu0 %v73
    %85 = vmatpush1.bf16.msra.mxu0 %v72
    %86 = vmatprep.subr.bf16.mxu0 0
    %87 = vmatpush1.bf16.msra.mxu0 0
    %88 = vmatprep.subr.bf16.mxu0 0
    %89 = vmatpush1.bf16.msra.mxu0 0
    %90 = vmatprep.subr.bf16.mxu0 0
    %91 = vmatpush1.bf16.msra.mxu0 0
    %92 = vmatprep.subr.bf16.mxu0 0
    %93 = vmatpush1.bf16.msra.mxu0 0
    %94 = vmatprep.subr.bf16.mxu0 0
    %95 = vmatpush1.bf16.msra.mxu0 0
    %96 = vmatprep.subr.bf16.mxu0 0
    %97 = vmatpush1.bf16.msra.mxu0 0
    %98 = vmatprep.subr.bf16.mxu0 0
    %99 = vmatpush1.bf16.msra.mxu0 0
    %100 = vmatprep.subr.bf16.mxu0 0
    %101 = vmatpush1.bf16.msra.mxu0 0
    %102 = vmatprep.subr.bf16.mxu0 0
    %103 = vmatpush1.bf16.msra.mxu0 0
    %104 = vmatprep.subr.bf16.mxu0 0
    %105 = vmatpush1.bf16.msra.mxu0 0
    %106 = vmatprep.subr.bf16.mxu0 0
    %107 = vmatpush1.bf16.msra.mxu0 0
    %108 = vmatprep.subr.bf16.mxu0 0
    %109 = vmatpush1.bf16.msra.mxu0 0
    %110 = vmatprep.subr.bf16.mxu0 0
    %111 = vmatpush1.bf16.msra.mxu0 0
    %112 = vmatprep.subr.bf16.mxu0 0
    %113 = vmatpush1.bf16.msra.mxu0 0
    %114 = vmatprep.subr.bf16.mxu0 0
    %115 = vmatpush1.bf16.msra.mxu0 0
    %116 = vmatprep.mubr.bf16.mxu0 0
    %117 = vmatmul.mubr.bf16.gmra.mrb[0].mxu0 %v82
    %v118 = vpop.f32.mrb[0].mxu0
    %v119 = vadd.f32 0.0, %v118
    %v120 = vpop.f32.mrb[0].mxu0
    %v121 = vadd.f32 0.0, %v120
    %v122 = vpop.f32.mrb[0].mxu0
    %v123 = vpop.f32.mrb[0].mxu0
    %124 = vdwg.mxu0
    %125 = vmatprep.subr.bf16.mxu0 %v75
    %126 = vmatpush1.bf16.msra.mxu0 %v74
    %127 = vmatprep.subr.bf16.mxu0 0
    %128 = vmatpush1.bf16.msra.mxu0 0
    %129 = vmatprep.subr.bf16.mxu0 0
    %130 = vmatpush1.bf16.msra.mxu0 0
    %131 = vmatprep.subr.bf16.mxu0 0
    %132 = vmatpush1.bf16.msra.mxu0 0
    %133 = vmatprep.subr.bf16.mxu0 0
    %134 = vmatpush1.bf16.msra.mxu0 0
    %135 = vmatprep.subr.bf16.mxu0 0
    %136 = vmatpush1.bf16.msra.mxu0 0
    %137 = vmatprep.subr.bf16.mxu0 0
    %138 = vmatpush1.bf16.msra.mxu0 0
    %139 = vmatprep.subr.bf16.mxu0 0
    %140 = vmatpush1.bf16.msra.mxu0 0
    %141 = vmatprep.subr.bf16.mxu0 0
    %142 = vmatpush1.bf16.msra.mxu0 0
    %143 = vmatprep.subr.bf16.mxu0 0
    %144 = vmatpush1.bf16.msra.mxu0 0
    %145 = vmatprep.subr.bf16.mxu0 0
    %146 = vmatpush1.bf16.msra.mxu0 0
    %147 = vmatprep.subr.bf16.mxu0 0
    %148 = vmatpush1.bf16.msra.mxu0 0
    %149 = vmatprep.subr.bf16.mxu0 0
    %150 = vmatpush1.bf16.msra.mxu0 0
    %151 = vmatprep.subr.bf16.mxu0 0
    %152 = vmatpush1.bf16.msra.mxu0 0
    %153 = vmatprep.subr.bf16.mxu0 0
    %154 = vmatpush1.bf16.msra.mxu0 0
    %155 = vmatprep.subr.bf16.mxu0 0
    %156 = vmatpush1.bf16.msra.mxu0 0
    %157 = vmatprep.mubr.bf16.mxu0 0
    %158 = vmatmul.mubr.bf16.gmra.mrb[0].mxu0 %v82
    %v159 = vpop.f32.mrb[0].mxu0
    %v160 = vadd.f32 0.0, %v159
    %v161 = vpop.f32.mrb[0].mxu0
    %v162 = vadd.f32 0.0, %v161
    %v163 = vpop.f32.mrb[0].mxu0
    %v164 = vpop.f32.mrb[0].mxu0
    %165 = vdwg.mxu0
    %v166 = vld [vmem:[%s8] sm:$0xff]
    %v167 = vld [vmem:[%s9] sm:$0xff]
    %v168 = vadd.f32 %v119, %v121
    %v169 = vadd.f32 %v168, %v160
    %v170 = vadd.f32 %v169, %v162
    %171 = vadd.xlane.f32.xlu0 %v170
    %v172 = vpop.xlane.xlu0 %171
    %v173 = vmul.f32 %v172, 0.001953125
    %v174 = vsub.f32 %v119, %v173
    %v175 = vsub.f32 %v121, %v173
    %v176 = vsub.f32 %v160, %v173
    %v177 = vsub.f32 %v162, %v173
    %v178 = vmul.f32 %v174, %v174
    %v179 = vmul.f32 %v175, %v175
    %v180 = vmul.f32 %v176, %v176
    %v181 = vmul.f32 %v177, %v177
    %v182 = vadd.f32 %v178, %v179
    %v183 = vadd.f32 %v182, %v180
    %v184 = vadd.f32 %v183, %v181
    %185 = vadd.xlane.f32.xlu0 %v184
    %v186 = vpop.xlane.xlu0 %185
    %v187 = vmul.f32 %v186, 0.001953125
    %v188 = vadd.f32 %v187, 1e-05
    %v189 = vrsqrt.pop %v188
    %v190 = vmul.f32 %v166, %v189
    %v191 = vmul.f32 %v173, %v190
    %v192 = vsub.f32 %v167, %v191
    %194 = vset.pattern.permute.xlu0 0
    %195 = vperm.xlu0 %194, %v190
    %v196 = vpop.permute.xlu0 %195
    %v198 = vmul.f32 %v119, %v196
    %v199 = vmul.f32 %v121, %v196
    %v200 = vmul.f32 %v160, %v196
    %v201 = vmul.f32 %v162, %v196
    %203 = vset.pattern.permute.xlu0 0
    %204 = vperm.xlu0 %203, %v192
    %v205 = vpop.permute.xlu0 %204
    %v207 = vadd.f32 %v198, %v205
    %v208 = vadd.f32 %v199, %v205
    %v209 = vadd.f32 %v200, %v205
    %v210 = vadd.f32 %v201, %v205
    %v211 = vmax.f32 %v207, 0.0
    %v212 = vmax.f32 %v208, 0.0
    %v213 = vmax.f32 %v209, 0.0
    %v214 = vmax.f32 %v210, 0.0
    %vm215 = vcmask 138240
    %216 = vst.msk [vmem:[#allocation2] sm:$0xff] %vm215, 0.0
    %vm217 = vcmask 277640
    %218 = vst.msk [vmem:[#allocation2 + $0x20] sm:$0xff] %vm217, 0.0
    %223 = vrot.lane.b32.xlu0 %v211, 17
    %v224 = vpop.permute.xlu0 %223
    %225 = vrot.lane.b32.xlu0 %v212, 17
    %v226 = vpop.permute.xlu0 %225
    %227 = vrot.lane.b32.xlu0 %v213, 17
    %v228 = vpop.permute.xlu0 %227
    %229 = vrot.lane.b32.xlu0 %v214, 17
    %v230 = vpop.permute.xlu0 %229
    %v231 = vsel %vm215, %v224, %v226
    %v232 = vsel %vm215, %v226, %v228
    %v233 = vsel %vm215, %v228, %v230
    %vm239 = vcmask 1047688
    %240 = vst.msk [vmem:[#allocation2] sm:$0xff] %vm239, %v224
    %241 = vst [vmem:[#allocation2 + $0x8] sm:$0xff] %v231
    %242 = vst [vmem:[#allocation2 + $0x10] sm:$0xff] %v232
    %243 = vst [vmem:[#allocation2 + $0x18] sm:$0xff] %v233
    %244 = vst.msk [vmem:[#allocation2 + $0x20] sm:$0xff] %vm215, %v230
    %v245 = vld [vmem:[#allocation2] sm:$0xff]
    %v246 = vld [vmem:[#allocation2 + $0x8] sm:$0xff]
    %v247 = vld [vmem:[#allocation2 + $0x10] sm:$0xff]
    %v248 = vld [vmem:[#allocation2 + $0x18] sm:$0xff]
    %v249 = vld [vmem:[%s6] ss:$8 sm:$0xf]
    %v251 = vlaneseq
    %v252 = vshrl.u32 %v251, 7
    %v253 = vsub.s32 0, %v252
    %v254 = vrot.slane %v249, %v253
    %v255 = vlaneseq
    %v256 = vshrl.u32 %v255, 7
    %v257 = vsub.s32 1, %v256
    %v258 = vrot.slane %v249, %v257
    %v259 = vlaneseq
    %v260 = vshrl.u32 %v259, 7
    %v261 = vsub.s32 2, %v260
    %v262 = vrot.slane %v249, %v261
    %v263 = vlaneseq
    %v264 = vshrl.u32 %v263, 7
    %v265 = vsub.s32 3, %v264
    %v266 = vrot.slane %v249, %v265
    %v271 = vmul.f32 %v245, %v254
    %v272 = vmul.f32 %v246, %v258
    %v273 = vmul.f32 %v247, %v262
    %v274 = vmul.f32 %v248, %v266
    %v275 = vld [vmem:[#allocation2 + $0x20] sm:$0xff]
    %s276 = scalar_lea.vmem %s6, 1
    %v277 = vld [vmem:[%s276] ss:$8 sm:$0xf]
    %v279 = vlaneseq
    %v280 = vshrl.u32 %v279, 7
    %v281 = vsub.s32 0, %v280
    %v282 = vrot.slane %v277, %v281
    %v283 = vlaneseq
    %v284 = vshrl.u32 %v283, 7
    %v285 = vsub.s32 1, %v284
    %v286 = vrot.slane %v277, %v285
    %v287 = vlaneseq
    %v288 = vshrl.u32 %v287, 7
    %v289 = vsub.s32 2, %v288
    %v290 = vrot.slane %v277, %v289
    %v291 = vlaneseq
    %v292 = vshrl.u32 %v291, 7
    %v293 = vsub.s32 3, %v292
    %v294 = vrot.slane %v277, %v293
    %295 = vrot.lane.b32.xlu0 %v282, 1
    %v296 = vpop.permute.xlu0 %295
    %297 = vrot.lane.b32.xlu0 %v286, 1
    %v298 = vpop.permute.xlu0 %297
    %299 = vrot.lane.b32.xlu0 %v290, 1
    %v300 = vpop.permute.xlu0 %299
    %301 = vrot.lane.b32.xlu0 %v294, 1
    %v302 = vpop.permute.xlu0 %301
    %vm303 = vcmask 7168
    %v304 = vsel %vm303, %v296, %v298
    %v305 = vsel %vm303, %v298, %v300
    %v306 = vsel %vm303, %v300, %v302
    %v312 = vmul.f32 %v245, %v296
    %v313 = vmul.f32 %v246, %v304
    %v314 = vmul.f32 %v247, %v305
    %v315 = vmul.f32 %v248, %v306
    %v316 = vmul.f32 %v275, %v302
    %s317 = scalar_lea.vmem %s6, 2
    %v318 = vld [vmem:[%s317] ss:$8 sm:$0xf]
    %v320 = vlaneseq
    %v321 = vshrl.u32 %v320, 7
    %v322 = vsub.s32 0, %v321
    %v323 = vrot.slane %v318, %v322
    %v324 = vlaneseq
    %v325 = vshrl.u32 %v324, 7
    %v326 = vsub.s32 1, %v325
    %v327 = vrot.slane %v318, %v326
    %v328 = vlaneseq
    %v329 = vshrl.u32 %v328, 7
    %v330 = vsub.s32 2, %v329
    %v331 = vrot.slane %v318, %v330
    %v332 = vlaneseq
    %v333 = vshrl.u32 %v332, 7
    %v334 = vsub.s32 3, %v333
    %v335 = vrot.slane %v318, %v334
    %336 = vrot.lane.b32.xlu0 %v323, 2
    %v337 = vpop.permute.xlu0 %336
    %338 = vrot.lane.b32.xlu0 %v327, 2
    %v339 = vpop.permute.xlu0 %338
    %340 = vrot.lane.b32.xlu0 %v331, 2
    %v341 = vpop.permute.xlu0 %340
    %342 = vrot.lane.b32.xlu0 %v335, 2
    %v343 = vpop.permute.xlu0 %342
    %vm344 = vcmask 15360
    %v345 = vsel %vm344, %v337, %v339
    %v346 = vsel %vm344, %v339, %v341
    %v347 = vsel %vm344, %v341, %v343
    %v353 = vmul.f32 %v245, %v337
    %v354 = vmul.f32 %v246, %v345
    %v355 = vmul.f32 %v247, %v346
    %v356 = vmul.f32 %v248, %v347
    %v357 = vmul.f32 %v275, %v343
    %s358 = scalar_lea.vmem %s6, 3
    %v359 = vld [vmem:[%s358] ss:$8 sm:$0xf]
    %v361 = vlaneseq
    %v362 = vshrl.u32 %v361, 7
    %v363 = vsub.s32 0, %v362
    %v364 = vrot.slane %v359, %v363
    %v365 = vlaneseq
    %v366 = vshrl.u32 %v365, 7
    %v367 = vsub.s32 1, %v366
    %v368 = vrot.slane %v359, %v367
    %v369 = vlaneseq
    %v370 = vshrl.u32 %v369, 7
    %v371 = vsub.s32 2, %v370
    %v372 = vrot.slane %v359, %v371
    %v373 = vlaneseq
    %v374 = vshrl.u32 %v373, 7
    %v375 = vsub.s32 3, %v374
    %v376 = vrot.slane %v359, %v375
    %377 = vrot.lane.b32.xlu0 %v364, 16
    %v378 = vpop.permute.xlu0 %377
    %379 = vrot.lane.b32.xlu0 %v368, 16
    %v380 = vpop.permute.xlu0 %379
    %381 = vrot.lane.b32.xlu0 %v372, 16
    %v382 = vpop.permute.xlu0 %381
    %383 = vrot.lane.b32.xlu0 %v376, 16
    %v384 = vpop.permute.xlu0 %383
    %v385 = vsel %vm80, %v378, %v380
    %v386 = vsel %vm80, %v380, %v382
    %v387 = vsel %vm80, %v382, %v384
    %v393 = vmul.f32 %v245, %v378
    %v394 = vmul.f32 %v246, %v385
    %v395 = vmul.f32 %v247, %v386
    %v396 = vmul.f32 %v248, %v387
    %v397 = vmul.f32 %v275, %v384
    %s398 = scalar_lea.vmem %s6, 4
    %v399 = vld [vmem:[%s398] ss:$8 sm:$0xf]
    %v401 = vlaneseq
    %v402 = vshrl.u32 %v401, 7
    %v403 = vsub.s32 0, %v402
    %v404 = vrot.slane %v399, %v403
    %v405 = vlaneseq
    %v406 = vshrl.u32 %v405, 7
    %v407 = vsub.s32 1, %v406
    %v408 = vrot.slane %v399, %v407
    %v409 = vlaneseq
    %v410 = vshrl.u32 %v409, 7
    %v411 = vsub.s32 2, %v410
    %v412 = vrot.slane %v399, %v411
    %v413 = vlaneseq
    %v414 = vshrl.u32 %v413, 7
    %v415 = vsub.s32 3, %v414
    %v416 = vrot.slane %v399, %v415
    %417 = vrot.lane.b32.xlu0 %v404, 17
    %v418 = vpop.permute.xlu0 %417
    %419 = vrot.lane.b32.xlu0 %v408, 17
    %v420 = vpop.permute.xlu0 %419
    %421 = vrot.lane.b32.xlu0 %v412, 17
    %v422 = vpop.permute.xlu0 %421
    %423 = vrot.lane.b32.xlu0 %v416, 17
    %v424 = vpop.permute.xlu0 %423
    %v425 = vsel %vm215, %v418, %v420
    %v426 = vsel %vm215, %v420, %v422
    %v427 = vsel %vm215, %v422, %v424
    %v433 = vmul.f32 %v245, %v418
    %v434 = vmul.f32 %v246, %v425
    %v435 = vmul.f32 %v247, %v426
    %v436 = vmul.f32 %v248, %v427
    %v437 = vmul.f32 %v275, %v424
    %s438 = scalar_lea.vmem %s6, 5
    %v439 = vld [vmem:[%s438] ss:$8 sm:$0xf]
    %v441 = vlaneseq
    %v442 = vshrl.u32 %v441, 7
    %v443 = vsub.s32 0, %v442
    %v444 = vrot.slane %v439, %v443
    %v445 = vlaneseq
    %v446 = vshrl.u32 %v445, 7
    %v447 = vsub.s32 1, %v446
    %v448 = vrot.slane %v439, %v447
    %v449 = vlaneseq
    %v450 = vshrl.u32 %v449, 7
    %v451 = vsub.s32 2, %v450
    %v452 = vrot.slane %v439, %v451
    %v453 = vlaneseq
    %v454 = vshrl.u32 %v453, 7
    %v455 = vsub.s32 3, %v454
    %v456 = vrot.slane %v439, %v455
    %457 = vrot.lane.b32.xlu0 %v444, 18
    %v458 = vpop.permute.xlu0 %457
    %459 = vrot.lane.b32.xlu0 %v448, 18
    %v460 = vpop.permute.xlu0 %459
    %461 = vrot.lane.b32.xlu0 %v452, 18
    %v462 = vpop.permute.xlu0 %461
    %463 = vrot.lane.b32.xlu0 %v456, 18
    %v464 = vpop.permute.xlu0 %463
    %vm465 = vcmask 146432
    %v466 = vsel %vm465, %v458, %v460
    %v467 = vsel %vm465, %v460, %v462
    %v468 = vsel %vm465, %v462, %v464
    %v474 = vmul.f32 %v245, %v458
    %v475 = vmul.f32 %v246, %v466
    %v476 = vmul.f32 %v247, %v467
    %v477 = vmul.f32 %v248, %v468
    %v478 = vmul.f32 %v275, %v464
    %s479 = scalar_lea.vmem %s6, 6
    %v480 = vld [vmem:[%s479] ss:$8 sm:$0xf]
    %v482 = vlaneseq
    %v483 = vshrl.u32 %v482, 7
    %v484 = vsub.s32 0, %v483
    %v485 = vrot.slane %v480, %v484
    %v486 = vlaneseq
    %v487 = vshrl.u32 %v486, 7
    %v488 = vsub.s32 1, %v487
    %v489 = vrot.slane %v480, %v488
    %v490 = vlaneseq
    %v491 = vshrl.u32 %v490, 7
    %v492 = vsub.s32 2, %v491
    %v493 = vrot.slane %v480, %v492
    %v494 = vlaneseq
    %v495 = vshrl.u32 %v494, 7
    %v496 = vsub.s32 3, %v495
    %v497 = vrot.slane %v480, %v496
    %498 = vrot.lane.b32.xlu0 %v485, 32
    %v499 = vpop.permute.xlu0 %498
    %500 = vrot.lane.b32.xlu0 %v489, 32
    %v501 = vpop.permute.xlu0 %500
    %502 = vrot.lane.b32.xlu0 %v493, 32
    %v503 = vpop.permute.xlu0 %502
    %504 = vrot.lane.b32.xlu0 %v497, 32
    %v505 = vpop.permute.xlu0 %504
    %vm506 = vcmask 261120
    %v507 = vsel %vm506, %v499, %v501
    %v508 = vsel %vm506, %v501, %v503
    %v509 = vsel %vm506, %v503, %v505
    %v515 = vmul.f32 %v245, %v499
    %v516 = vmul.f32 %v246, %v507
    %v517 = vmul.f32 %v247, %v508
    %v518 = vmul.f32 %v248, %v509
    %v519 = vmul.f32 %v275, %v505
    %s520 = scalar_lea.vmem %s6, 7
    %v521 = vld [vmem:[%s520] ss:$8 sm:$0xf]
    %v523 = vlaneseq
    %v524 = vshrl.u32 %v523, 7
    %v525 = vsub.s32 0, %v524
    %v526 = vrot.slane %v521, %v525
    %v527 = vlaneseq
    %v528 = vshrl.u32 %v527, 7
    %v529 = vsub.s32 1, %v528
    %v530 = vrot.slane %v521, %v529
    %v531 = vlaneseq
    %v532 = vshrl.u32 %v531, 7
    %v533 = vsub.s32 2, %v532
    %v534 = vrot.slane %v521, %v533
    %v535 = vlaneseq
    %v536 = vshrl.u32 %v535, 7
    %v537 = vsub.s32 3, %v536
    %v538 = vrot.slane %v521, %v537
    %539 = vrot.lane.b32.xlu0 %v526, 33
    %v540 = vpop.permute.xlu0 %539
    %541 = vrot.lane.b32.xlu0 %v530, 33
    %v542 = vpop.permute.xlu0 %541
    %543 = vrot.lane.b32.xlu0 %v534, 33
    %v544 = vpop.permute.xlu0 %543
    %545 = vrot.lane.b32.xlu0 %v538, 33
    %v546 = vpop.permute.xlu0 %545
    %vm547 = vcmask 269312
    %v548 = vsel %vm547, %v540, %v542
    %v549 = vsel %vm547, %v542, %v544
    %v550 = vsel %vm547, %v544, %v546
    %v556 = vmul.f32 %v245, %v540
    %v557 = vmul.f32 %v246, %v548
    %v558 = vmul.f32 %v247, %v549
    %v559 = vmul.f32 %v248, %v550
    %v560 = vmul.f32 %v275, %v546
    %s561 = scalar_lea.vmem %s6, 32
    %v562 = vld [vmem:[%s561] ss:$8 sm:$0xf]
    %v564 = vlaneseq
    %v565 = vshrl.u32 %v564, 7
    %v566 = vsub.s32 0, %v565
    %v567 = vrot.slane %v562, %v566
    %v568 = vlaneseq
    %v569 = vshrl.u32 %v568, 7
    %v570 = vsub.s32 1, %v569
    %v571 = vrot.slane %v562, %v570
    %v572 = vlaneseq
    %v573 = vshrl.u32 %v572, 7
    %v574 = vsub.s32 2, %v573
    %v575 = vrot.slane %v562, %v574
    %v576 = vlaneseq
    %v577 = vshrl.u32 %v576, 7
    %v578 = vsub.s32 3, %v577
    %v579 = vrot.slane %v562, %v578
    %580 = vrot.lane.b32.xlu0 %v567, 34
    %v581 = vpop.permute.xlu0 %580
    %582 = vrot.lane.b32.xlu0 %v571, 34
    %v583 = vpop.permute.xlu0 %582
    %584 = vrot.lane.b32.xlu0 %v575, 34
    %v585 = vpop.permute.xlu0 %584
    %586 = vrot.lane.b32.xlu0 %v579, 34
    %v587 = vpop.permute.xlu0 %586
    %vm588 = vcmask 277504
    %v589 = vsel %vm588, %v581, %v583
    %v590 = vsel %vm588, %v583, %v585
    %v591 = vsel %vm588, %v585, %v587
    %v597 = vmul.f32 %v245, %v581
    %v598 = vmul.f32 %v246, %v589
    %v599 = vmul.f32 %v247, %v590
    %v600 = vmul.f32 %v248, %v591
    %v601 = vmul.f32 %v275, %v587
    %607 = vrot.lane.b32.xlu0 %v312, 127
    %v608 = vpop.permute.xlu0 %607
    %609 = vrot.lane.b32.xlu0 %v313, 127
    %v610 = vpop.permute.xlu0 %609
    %611 = vrot.lane.b32.xlu0 %v314, 127
    %v612 = vpop.permute.xlu0 %611
    %613 = vrot.lane.b32.xlu0 %v315, 127
    %v614 = vpop.permute.xlu0 %613
    %615 = vrot.lane.b32.xlu0 %v316, 127
    %v616 = vpop.permute.xlu0 %615
    %vm617 = vcmask 1039360
    %v618 = vsel %vm617, %v608, %v610
    %v619 = vsel %vm617, %v610, %v612
    %v620 = vsel %vm617, %v612, %v614
    %v621 = vsel %vm617, %v614, %v616
    %631 = vrot.lane.b32.xlu0 %v353, 126
    %v632 = vpop.permute.xlu0 %631
    %633 = vrot.lane.b32.xlu0 %v354, 126
    %v634 = vpop.permute.xlu0 %633
    %635 = vrot.lane.b32.xlu0 %v355, 126
    %v636 = vpop.permute.xlu0 %635
    %637 = vrot.lane.b32.xlu0 %v356, 126
    %v638 = vpop.permute.xlu0 %637
    %639 = vrot.lane.b32.xlu0 %v357, 126
    %v640 = vpop.permute.xlu0 %639
    %vm641 = vcmask 1031168
    %v642 = vsel %vm641, %v632, %v634
    %v643 = vsel %vm641, %v634, %v636
    %v644 = vsel %vm641, %v636, %v638
    %v645 = vsel %vm641, %v638, %v640
    %655 = vrot.lane.b32.xlu0 %v393, 112
    %v656 = vpop.permute.xlu0 %655
    %657 = vrot.lane.b32.xlu0 %v394, 112
    %v658 = vpop.permute.xlu0 %657
    %659 = vrot.lane.b32.xlu0 %v395, 112
    %v660 = vpop.permute.xlu0 %659
    %661 = vrot.lane.b32.xlu0 %v396, 112
    %v662 = vpop.permute.xlu0 %661
    %663 = vrot.lane.b32.xlu0 %v397, 112
    %v664 = vpop.permute.xlu0 %663
    %vm665 = vcmask 916480
    %v666 = vsel %vm665, %v656, %v658
    %v667 = vsel %vm665, %v658, %v660
    %v668 = vsel %vm665, %v660, %v662
    %v669 = vsel %vm665, %v662, %v664
    %679 = vrot.lane.b32.xlu0 %v433, 111
    %v680 = vpop.permute.xlu0 %679
    %681 = vrot.lane.b32.xlu0 %v434, 111
    %v682 = vpop.permute.xlu0 %681
    %683 = vrot.lane.b32.xlu0 %v435, 111
    %v684 = vpop.permute.xlu0 %683
    %685 = vrot.lane.b32.xlu0 %v436, 111
    %v686 = vpop.permute.xlu0 %685
    %687 = vrot.lane.b32.xlu0 %v437, 111
    %v688 = vpop.permute.xlu0 %687
    %vm689 = vcmask 908288
    %v690 = vsel %vm689, %v680, %v682
    %v691 = vsel %vm689, %v682, %v684
    %v692 = vsel %vm689, %v684, %v686
    %v693 = vsel %vm689, %v686, %v688
    %703 = vrot.lane.b32.xlu0 %v474, 110
    %v704 = vpop.permute.xlu0 %703
    %705 = vrot.lane.b32.xlu0 %v475, 110
    %v706 = vpop.permute.xlu0 %705
    %707 = vrot.lane.b32.xlu0 %v476, 110
    %v708 = vpop.permute.xlu0 %707
    %709 = vrot.lane.b32.xlu0 %v477, 110
    %v710 = vpop.permute.xlu0 %709
    %711 = vrot.lane.b32.xlu0 %v478, 110
    %v712 = vpop.permute.xlu0 %711
    %vm713 = vcmask 900096
    %v714 = vsel %vm713, %v704, %v706
    %v715 = vsel %vm713, %v706, %v708
    %v716 = vsel %vm713, %v708, %v710
    %v717 = vsel %vm713, %v710, %v712
    %727 = vrot.lane.b32.xlu0 %v515, 96
    %v728 = vpop.permute.xlu0 %727
    %729 = vrot.lane.b32.xlu0 %v516, 96
    %v730 = vpop.permute.xlu0 %729
    %731 = vrot.lane.b32.xlu0 %v517, 96
    %v732 = vpop.permute.xlu0 %731
    %733 = vrot.lane.b32.xlu0 %v518, 96
    %v734 = vpop.permute.xlu0 %733
    %735 = vrot.lane.b32.xlu0 %v519, 96
    %v736 = vpop.permute.xlu0 %735
    %vm737 = vcmask 785408
    %v738 = vsel %vm737, %v728, %v730
    %v739 = vsel %vm737, %v730, %v732
    %v740 = vsel %vm737, %v732, %v734
    %v741 = vsel %vm737, %v734, %v736
    %751 = vrot.lane.b32.xlu0 %v556, 95
    %v752 = vpop.permute.xlu0 %751
    %753 = vrot.lane.b32.xlu0 %v557, 95
    %v754 = vpop.permute.xlu0 %753
    %755 = vrot.lane.b32.xlu0 %v558, 95
    %v756 = vpop.permute.xlu0 %755
    %757 = vrot.lane.b32.xlu0 %v559, 95
    %v758 = vpop.permute.xlu0 %757
    %759 = vrot.lane.b32.xlu0 %v560, 95
    %v760 = vpop.permute.xlu0 %759
    %vm761 = vcmask 777216
    %v762 = vsel %vm761, %v752, %v754
    %v763 = vsel %vm761, %v754, %v756
    %v764 = vsel %vm761, %v756, %v758
    %v765 = vsel %vm761, %v758, %v760
    %775 = vrot.lane.b32.xlu0 %v597, 94
    %v776 = vpop.permute.xlu0 %775
    %777 = vrot.lane.b32.xlu0 %v598, 94
    %v778 = vpop.permute.xlu0 %777
    %779 = vrot.lane.b32.xlu0 %v599, 94
    %v780 = vpop.permute.xlu0 %779
    %781 = vrot.lane.b32.xlu0 %v600, 94
    %v782 = vpop.permute.xlu0 %781
    %783 = vrot.lane.b32.xlu0 %v601, 94
    %v784 = vpop.permute.xlu0 %783
    %vm785 = vcmask 769024
    %v786 = vsel %vm785, %v776, %v778
    %v787 = vsel %vm785, %v778, %v780
    %v788 = vsel %vm785, %v780, %v782
    %v789 = vsel %vm785, %v782, %v784
    %v794 = vpack.c.bf16 %v618, %v271
    %v795 = vpack.c.bf16 %v619, %v272
    %v796 = vpack.c.bf16 %v620, %v273
    %v797 = vpack.c.bf16 %v621, %v274
    %v798 = vpack.c.bf16 %v666, %v642
    %v799 = vpack.c.bf16 %v667, %v643
    %v800 = vpack.c.bf16 %v668, %v644
    %v801 = vpack.c.bf16 %v669, %v645
    %v802 = vpack.c.bf16 %v714, %v690
    %v803 = vpack.c.bf16 %v715, %v691
    %v804 = vpack.c.bf16 %v716, %v692
    %v805 = vpack.c.bf16 %v717, %v693
    %v806 = vpack.c.bf16 %v762, %v738
    %v807 = vpack.c.bf16 %v763, %v739
    %v808 = vpack.c.bf16 %v764, %v740
    %v809 = vpack.c.bf16 %v765, %v741
    %v810 = vpack.c.bf16 %v786, %v786
    %v811 = vpack.c.bf16 %v787, %v787
    %v812 = vpack.c.bf16 %v788, %v788
    %v813 = vpack.c.bf16 %v789, %v789
    %v814 = vld [vmem:[%s3] sm:$0xf]
    %vm815 = vcmask 588800
    %v817 = vsel %vm815, %v814, 0
    %vm819 = vcmask 1043456
    %v821 = vsel %vm819, %v810, 0
    %v824 = vsel %vm819, %v811, 0
    %v827 = vsel %vm819, %v812, 0
    %v830 = vsel %vm819, %v813, 0
    %832 = vmatprep.subr.bf16.mxu0 %v795
    %833 = vmatpush1.bf16.msra.mxu0 %v794
    %834 = vmatprep.subr.bf16.mxu0 %v799
    %835 = vmatpush1.bf16.msra.mxu0 %v798
    %836 = vmatprep.subr.bf16.mxu0 %v803
    %837 = vmatpush1.bf16.msra.mxu0 %v802
    %838 = vmatprep.subr.bf16.mxu0 %v807
    %839 = vmatpush1.bf16.msra.mxu0 %v806
    %840 = vmatprep.subr.bf16.mxu0 %v824
    %841 = vmatpush1.bf16.msra.mxu0 %v821
    %842 = vmatprep.subr.bf16.mxu0 0
    %843 = vmatpush1.bf16.msra.mxu0 0
    %844 = vmatprep.subr.bf16.mxu0 0
    %845 = vmatpush1.bf16.msra.mxu0 0
    %846 = vmatprep.subr.bf16.mxu0 0
    %847 = vmatpush1.bf16.msra.mxu0 0
    %848 = vmatprep.subr.bf16.mxu0 0
    %849 = vmatpush1.bf16.msra.mxu0 0
    %850 = vmatprep.subr.bf16.mxu0 0
    %851 = vmatpush1.bf16.msra.mxu0 0
    %852 = vmatprep.subr.bf16.mxu0 0
    %853 = vmatpush1.bf16.msra.mxu0 0
    %854 = vmatprep.subr.bf16.mxu0 0
    %855 = vmatpush1.bf16.msra.mxu0 0
    %856 = vmatprep.subr.bf16.mxu0 0
    %857 = vmatpush1.bf16.msra.mxu0 0
    %858 = vmatprep.subr.bf16.mxu0 0
    %859 = vmatpush1.bf16.msra.mxu0 0
    %860 = vmatprep.subr.bf16.mxu0 0
    %861 = vmatpush1.bf16.msra.mxu0 0
    %862 = vmatprep.subr.bf16.mxu0 0
    %863 = vmatpush1.bf16.msra.mxu0 0
    %864 = vmatprep.mubr.bf16.mxu0 0
    %865 = vmatmul.mubr.bf16.gmra.mrb[0].mxu0 %v817
    %v866 = vpop.f32.mrb[0].mxu0
    %v867 = vadd.f32 0.0, %v866
    %v868 = vpop.f32.mrb[0].mxu0
    %v869 = vadd.f32 0.0, %v868
    %v870 = vpop.f32.mrb[0].mxu0
    %v871 = vpop.f32.mrb[0].mxu0
    %872 = vdwg.mxu0
    %873 = vmatprep.subr.bf16.mxu0 %v797
    %874 = vmatpush1.bf16.msra.mxu0 %v796
    %875 = vmatprep.subr.bf16.mxu0 %v801
    %876 = vmatpush1.bf16.msra.mxu0 %v800
    %877 = vmatprep.subr.bf16.mxu0 %v805
    %878 = vmatpush1.bf16.msra.mxu0 %v804
    %879 = vmatprep.subr.bf16.mxu0 %v809
    %880 = vmatpush1.bf16.msra.mxu0 %v808
    %881 = vmatprep.subr.bf16.mxu0 %v830
    %882 = vmatpush1.bf16.msra.mxu0 %v827
    %883 = vmatprep.subr.bf16.mxu0 0
    %884 = vmatpush1.bf16.msra.mxu0 0
    %885 = vmatprep.subr.bf16.mxu0 0
    %886 = vmatpush1.bf16.msra.mxu0 0
    %887 = vmatprep.subr.bf16.mxu0 0
    %888 = vmatpush1.bf16.msra.mxu0 0
    %889 = vmatprep.subr.bf16.mxu0 0
    %890 = vmatpush1.bf16.msra.mxu0 0
    %891 = vmatprep.subr.bf16.mxu0 0
    %892 = vmatpush1.bf16.msra.mxu0 0
    %893 = vmatprep.subr.bf16.mxu0 0
    %894 = vmatpush1.bf16.msra.mxu0 0
    %895 = vmatprep.subr.bf16.mxu0 0
    %896 = vmatpush1.bf16.msra.mxu0 0
    %897 = vmatprep.subr.bf16.mxu0 0
    %898 = vmatpush1.bf16.msra.mxu0 0
    %899 = vmatprep.subr.bf16.mxu0 0
    %900 = vmatpush1.bf16.msra.mxu0 0
    %901 = vmatprep.subr.bf16.mxu0 0
    %902 = vmatpush1.bf16.msra.mxu0 0
    %903 = vmatprep.subr.bf16.mxu0 0
    %904 = vmatpush1.bf16.msra.mxu0 0
    %905 = vmatprep.mubr.bf16.mxu0 0
    %906 = vmatmul.mubr.bf16.gmra.mrb[0].mxu0 %v817
    %v907 = vpop.f32.mrb[0].mxu0
    %v908 = vadd.f32 0.0, %v907
    %v909 = vpop.f32.mrb[0].mxu0
    %v910 = vadd.f32 0.0, %v909
    %v911 = vpop.f32.mrb[0].mxu0
    %v912 = vpop.f32.mrb[0].mxu0
    %913 = vdwg.mxu0
    %v914 = vld [vmem:[%s7] sm:$0xff]
    %v915 = vld [vmem:[%s7 + $0x8] sm:$0xff]
    %v917 = vsel %vm80, %v867, 0
    %919 = vmatprep.subr.mxu0 0.0
    %920 = vmatpush1.msra.mxu0 %v914
    %921 = vmatprep.subr.mxu0 0.0
    %922 = vmatpush1.msra.mxu0 %v915
    %923 = vmatprep.subr.mxu0 0.0
    %924 = vmatpush1.msra.mxu0 0.0
    %925 = vmatprep.subr.mxu0 0.0
    %926 = vmatpush1.msra.mxu0 0.0
    %927 = vmatprep.subr.mxu0 0.0
    %928 = vmatpush1.msra.mxu0 0.0
    %929 = vmatprep.subr.mxu0 0.0
    %930 = vmatpush1.msra.mxu0 0.0
    %931 = vmatprep.subr.mxu0 0.0
    %932 = vmatpush1.msra.mxu0 0.0
    %933 = vmatprep.subr.mxu0 0.0
    %934 = vmatpush1.msra.mxu0 0.0
    %935 = vmatprep.subr.mxu0 0.0
    %936 = vmatpush1.msra.mxu0 0.0
    %937 = vmatprep.subr.mxu0 0.0
    %938 = vmatpush1.msra.mxu0 0.0
    %939 = vmatprep.subr.mxu0 0.0
    %940 = vmatpush1.msra.mxu0 0.0
    %941 = vmatprep.subr.mxu0 0.0
    %942 = vmatpush1.msra.mxu0 0.0
    %943 = vmatprep.subr.mxu0 0.0
    %944 = vmatpush1.msra.mxu0 0.0
    %945 = vmatprep.subr.mxu0 0.0
    %946 = vmatpush1.msra.mxu0 0.0
    %947 = vmatprep.subr.mxu0 0.0
    %948 = vmatpush1.msra.mxu0 0.0
    %949 = vmatprep.subr.mxu0 0.0
    %950 = vmatpush1.msra.mxu0 0.0
    %951 = vmatprep.subr.mxu0 0.0
    %952 = vmatpush1.msra.mxu0 0.0
    %953 = vmatprep.subr.mxu0 0.0
    %954 = vmatpush1.msra.mxu0 0.0
    %955 = vmatprep.subr.mxu0 0.0
    %956 = vmatpush1.msra.mxu0 0.0
    %957 = vmatprep.subr.mxu0 0.0
    %958 = vmatpush1.msra.mxu0 0.0
    %959 = vmatprep.subr.mxu0 0.0
    %960 = vmatpush1.msra.mxu0 0.0
    %961 = vmatprep.subr.mxu0 0.0
    %962 = vmatpush1.msra.mxu0 0.0
    %963 = vmatprep.subr.mxu0 0.0
    %964 = vmatpush1.msra.mxu0 0.0
    %965 = vmatprep.subr.mxu0 0.0
    %966 = vmatpush1.msra.mxu0 0.0
    %967 = vmatprep.subr.mxu0 0.0
    %968 = vmatpush1.msra.mxu0 0.0
    %969 = vmatprep.subr.mxu0 0.0
    %970 = vmatpush1.msra.mxu0 0.0
    %971 = vmatprep.subr.mxu0 0.0
    %972 = vmatpush1.msra.mxu0 0.0
    %973 = vmatprep.subr.mxu0 0.0
    %974 = vmatpush1.msra.mxu0 0.0
    %975 = vmatprep.subr.mxu0 0.0
    %976 = vmatpush1.msra.mxu0 0.0
    %977 = vmatprep.subr.mxu0 0.0
    %978 = vmatpush1.msra.mxu0 0.0
    %979 = vmatprep.subr.mxu0 0.0
    %980 = vmatpush1.msra.mxu0 0.0
    %981 = vmatprep.subr.mxu0 0.0
    %982 = vmatpush1.msra.mxu0 0.0
    %983 = vmatprep.mubr.f32.mxu0 0.0
    %984 = vmatmul.mubr.f32.gmra.mrb[0].mxu0 %v917
    %v985 = vpop.f32.mrb[0].mxu0
    %v986 = vadd.f32 0.0, %v985
    %v987 = vpop.f32.mrb[0].mxu0
    %988 = vdwg.mxu0
    %vm989 = vcmask 64512
    %990 = vst.msk [vmem:[#allocation3] sm:$0xff] %vm989, %v986
    %991 = vrot.lane.b32.xlu0 %v867, 96
    %v992 = vpop.permute.xlu0 %991
    %v993 = vsel %vm80, %v992, 0
    %995 = vmatprep.subr.mxu0 0.0
    %996 = vmatpush1.msra.mxu0 %v914
    %997 = vmatprep.subr.mxu0 0.0
    %998 = vmatpush1.msra.mxu0 %v915
    %999 = vmatprep.subr.mxu0 0.0
    %1000 = vmatpush1.msra.mxu0 0.0
    %1001 = vmatprep.subr.mxu0 0.0
    %1002 = vmatpush1.msra.mxu0 0.0
    %1003 = vmatprep.subr.mxu0 0.0
    %1004 = vmatpush1.msra.mxu0 0.0
    %1005 = vmatprep.subr.mxu0 0.0
    %1006 = vmatpush1.msra.mxu0 0.0
    %1007 = vmatprep.subr.mxu0 0.0
    %1008 = vmatpush1.msra.mxu0 0.0
    %1009 = vmatprep.subr.mxu0 0.0
    %1010 = vmatpush1.msra.mxu0 0.0
    %1011 = vmatprep.subr.mxu0 0.0
    %1012 = vmatpush1.msra.mxu0 0.0
    %1013 = vmatprep.subr.mxu0 0.0
    %1014 = vmatpush1.msra.mxu0 0.0
    %1015 = vmatprep.subr.mxu0 0.0
    %1016 = vmatpush1.msra.mxu0 0.0
    %1017 = vmatprep.subr.mxu0 0.0
    %1018 = vmatpush1.msra.mxu0 0.0
    %1019 = vmatprep.subr.mxu0 0.0
    %1020 = vmatpush1.msra.mxu0 0.0
    %1021 = vmatprep.subr.mxu0 0.0
    %1022 = vmatpush1.msra.mxu0 0.0
    %1023 = vmatprep.subr.mxu0 0.0
    %1024 = vmatpush1.msra.mxu0 0.0
    %1025 = vmatprep.subr.mxu0 0.0
    %1026 = vmatpush1.msra.mxu0 0.0
    %1027 = vmatprep.subr.mxu0 0.0
    %1028 = vmatpush1.msra.mxu0 0.0
    %1029 = vmatprep.subr.mxu0 0.0
    %1030 = vmatpush1.msra.mxu0 0.0
    %1031 = vmatprep.subr.mxu0 0.0
    %1032 = vmatpush1.msra.mxu0 0.0
    %1033 = vmatprep.subr.mxu0 0.0
    %1034 = vmatpush1.msra.mxu0 0.0
    %1035 = vmatprep.subr.mxu0 0.0
    %1036 = vmatpush1.msra.mxu0 0.0
    %1037 = vmatprep.subr.mxu0 0.0
    %1038 = vmatpush1.msra.mxu0 0.0
    %1039 = vmatprep.subr.mxu0 0.0
    %1040 = vmatpush1.msra.mxu0 0.0
    %1041 = vmatprep.subr.mxu0 0.0
    %1042 = vmatpush1.msra.mxu0 0.0
    %1043 = vmatprep.subr.mxu0 0.0
    %1044 = vmatpush1.msra.mxu0 0.0
    %1045 = vmatprep.subr.mxu0 0.0
    %1046 = vmatpush1.msra.mxu0 0.0
    %1047 = vmatprep.subr.mxu0 0.0
    %1048 = vmatpush1.msra.mxu0 0.0
    %1049 = vmatprep.subr.mxu0 0.0
    %1050 = vmatpush1.msra.mxu0 0.0
    %1051 = vmatprep.subr.mxu0 0.0
    %1052 = vmatpush1.msra.mxu0 0.0
    %1053 = vmatprep.subr.mxu0 0.0
    %1054 = vmatpush1.msra.mxu0 0.0
    %1055 = vmatprep.subr.mxu0 0.0
    %1056 = vmatpush1.msra.mxu0 0.0
    %1057 = vmatprep.subr.mxu0 0.0
    %1058 = vmatpush1.msra.mxu0 0.0
    %1059 = vmatprep.mubr.f32.mxu0 0.0
    %1060 = vmatmul.mubr.f32.gmra.mrb[0].mxu0 %v993
    %v1061 = vpop.f32.mrb[0].mxu0
    %v1062 = vadd.f32 0.0, %v1061
    %v1063 = vpop.f32.mrb[0].mxu0
    %1064 = vdwg.mxu0
    %1066 = vrot.lane.b32.xlu0 %v1062, 8
    %v1067 = vpop.permute.xlu0 %1066
    %vm1069 = vcmask 130112
    %1070 = vst.msk [vmem:[#allocation3] sm:$0xff] %vm1069, %v1067
    %1071 = vrot.lane.b32.xlu0 %v867, 64
    %v1072 = vpop.permute.xlu0 %1071
    %v1073 = vsel %vm80, %v1072, 0
    %1075 = vmatprep.subr.mxu0 0.0
    %1076 = vmatpush1.msra.mxu0 %v914
    %1077 = vmatprep.subr.mxu0 0.0
    %1078 = vmatpush1.msra.mxu0 %v915
    %1079 = vmatprep.subr.mxu0 0.0
    %1080 = vmatpush1.msra.mxu0 0.0
    %1081 = vmatprep.subr.mxu0 0.0
    %1082 = vmatpush1.msra.mxu0 0.0
    %1083 = vmatprep.subr.mxu0 0.0
    %1084 = vmatpush1.msra.mxu0 0.0
    %1085 = vmatprep.subr.mxu0 0.0
    %1086 = vmatpush1.msra.mxu0 0.0
    %1087 = vmatprep.subr.mxu0 0.0
    %1088 = vmatpush1.msra.mxu0 0.0
    %1089 = vmatprep.subr.mxu0 0.0
    %1090 = vmatpush1.msra.mxu0 0.0
    %1091 = vmatprep.subr.mxu0 0.0
    %1092 = vmatpush1.msra.mxu0 0.0
    %1093 = vmatprep.subr.mxu0 0.0
    %1094 = vmatpush1.msra.mxu0 0.0
    %1095 = vmatprep.subr.mxu0 0.0
    %1096 = vmatpush1.msra.mxu0 0.0
    %1097 = vmatprep.subr.mxu0 0.0
    %1098 = vmatpush1.msra.mxu0 0.0
    %1099 = vmatprep.subr.mxu0 0.0
    %1100 = vmatpush1.msra.mxu0 0.0
    %1101 = vmatprep.subr.mxu0 0.0
    %1102 = vmatpush1.msra.mxu0 0.0
    %1103 = vmatprep.subr.mxu0 0.0
    %1104 = vmatpush1.msra.mxu0 0.0
    %1105 = vmatprep.subr.mxu0 0.0
    %1106 = vmatpush1.msra.mxu0 0.0
    %1107 = vmatprep.subr.mxu0 0.0
    %1108 = vmatpush1.msra.mxu0 0.0
    %1109 = vmatprep.subr.mxu0 0.0
    %1110 = vmatpush1.msra.mxu0 0.0
    %1111 = vmatprep.subr.mxu0 0.0
    %1112 = vmatpush1.msra.mxu0 0.0
    %1113 = vmatprep.subr.mxu0 0.0
    %1114 = vmatpush1.msra.mxu0 0.0
    %1115 = vmatprep.subr.mxu0 0.0
    %1116 = vmatpush1.msra.mxu0 0.0
    %1117 = vmatprep.subr.mxu0 0.0
    %1118 = vmatpush1.msra.mxu0 0.0
    %1119 = vmatprep.subr.mxu0 0.0
    %1120 = vmatpush1.msra.mxu0 0.0
    %1121 = vmatprep.subr.mxu0 0.0
    %1122 = vmatpush1.msra.mxu0 0.0
    %1123 = vmatprep.subr.mxu0 0.0
    %1124 = vmatpush1.msra.mxu0 0.0
    %1125 = vmatprep.subr.mxu0 0.0
    %1126 = vmatpush1.msra.mxu0 0.0
    %1127 = vmatprep.subr.mxu0 0.0
    %1128 = vmatpush1.msra.mxu0 0.0
    %1129 = vmatprep.subr.mxu0 0.0
    %1130 = vmatpush1.msra.mxu0 0.0
    %1131 = vmatprep.subr.mxu0 0.0
    %1132 = vmatpush1.msra.mxu0 0.0
    %1133 = vmatprep.subr.mxu0 0.0
    %1134 = vmatpush1.msra.mxu0 0.0
    %1135 = vmatprep.subr.mxu0 0.0
    %1136 = vmatpush1.msra.mxu0 0.0
    %1137 = vmatprep.subr.mxu0 0.0
    %1138 = vmatpush1.msra.mxu0 0.0
    %1139 = vmatprep.mubr.f32.mxu0 0.0
    %1140 = vmatmul.mubr.f32.gmra.mrb[0].mxu0 %v1073
    %v1141 = vpop.f32.mrb[0].mxu0
    %v1142 = vadd.f32 0.0, %v1141
    %v1143 = vpop.f32.mrb[0].mxu0
    %1144 = vdwg.mxu0
    %1146 = vrot.lane.b32.xlu0 %v1142, 16
    %v1147 = vpop.permute.xlu0 %1146
    %vm1149 = vcmask 195712
    %1150 = vst.msk [vmem:[#allocation3] sm:$0xff] %vm1149, %v1147
    %1151 = vrot.lane.b32.xlu0 %v867, 32
    %v1152 = vpop.permute.xlu0 %1151
    %v1153 = vsel %vm80, %v1152, 0
    %1155 = vmatprep.subr.mxu0 0.0
    %1156 = vmatpush1.msra.mxu0 %v914
    %1157 = vmatprep.subr.mxu0 0.0
    %1158 = vmatpush1.msra.mxu0 %v915
    %1159 = vmatprep.subr.mxu0 0.0
    %1160 = vmatpush1.msra.mxu0 0.0
    %1161 = vmatprep.subr.mxu0 0.0
    %1162 = vmatpush1.msra.mxu0 0.0
    %1163 = vmatprep.subr.mxu0 0.0
    %1164 = vmatpush1.msra.mxu0 0.0
    %1165 = vmatprep.subr.mxu0 0.0
    %1166 = vmatpush1.msra.mxu0 0.0
    %1167 = vmatprep.subr.mxu0 0.0
    %1168 = vmatpush1.msra.mxu0 0.0
    %1169 = vmatprep.subr.mxu0 0.0
    %1170 = vmatpush1.msra.mxu0 0.0
    %1171 = vmatprep.subr.mxu0 0.0
    %1172 = vmatpush1.msra.mxu0 0.0
    %1173 = vmatprep.subr.mxu0 0.0
    %1174 = vmatpush1.msra.mxu0 0.0
    %1175 = vmatprep.subr.mxu0 0.0
    %1176 = vmatpush1.msra.mxu0 0.0
    %1177 = vmatprep.subr.mxu0 0.0
    %1178 = vmatpush1.msra.mxu0 0.0
    %1179 = vmatprep.subr.mxu0 0.0
    %1180 = vmatpush1.msra.mxu0 0.0
    %1181 = vmatprep.subr.mxu0 0.0
    %1182 = vmatpush1.msra.mxu0 0.0
    %1183 = vmatprep.subr.mxu0 0.0
    %1184 = vmatpush1.msra.mxu0 0.0
    %1185 = vmatprep.subr.mxu0 0.0
    %1186 = vmatpush1.msra.mxu0 0.0
    %1187 = vmatprep.subr.mxu0 0.0
    %1188 = vmatpush1.msra.mxu0 0.0
    %1189 = vmatprep.subr.mxu0 0.0
    %1190 = vmatpush1.msra.mxu0 0.0
    %1191 = vmatprep.subr.mxu0 0.0
    %1192 = vmatpush1.msra.mxu0 0.0
    %1193 = vmatprep.subr.mxu0 0.0
    %1194 = vmatpush1.msra.mxu0 0.0
    %1195 = vmatprep.subr.mxu0 0.0
    %1196 = vmatpush1.msra.mxu0 0.0
    %1197 = vmatprep.subr.mxu0 0.0
    %1198 = vmatpush1.msra.mxu0 0.0
    %1199 = vmatprep.subr.mxu0 0.0
    %1200 = vmatpush1.msra.mxu0 0.0
    %1201 = vmatprep.subr.mxu0 0.0
    %1202 = vmatpush1.msra.mxu0 0.0
    %1203 = vmatprep.subr.mxu0 0.0
    %1204 = vmatpush1.msra.mxu0 0.0
    %1205 = vmatprep.subr.mxu0 0.0
    %1206 = vmatpush1.msra.mxu0 0.0
    %1207 = vmatprep.subr.mxu0 0.0
    %1208 = vmatpush1.msra.mxu0 0.0
    %1209 = vmatprep.subr.mxu0 0.0
    %1210 = vmatpush1.msra.mxu0 0.0
    %1211 = vmatprep.subr.mxu0 0.0
    %1212 = vmatpush1.msra.mxu0 0.0
    %1213 = vmatprep.subr.mxu0 0.0
    %1214 = vmatpush1.msra.mxu0 0.0
    %1215 = vmatprep.subr.mxu0 0.0
    %1216 = vmatpush1.msra.mxu0 0.0
    %1217 = vmatprep.subr.mxu0 0.0
    %1218 = vmatpush1.msra.mxu0 0.0
    %1219 = vmatprep.mubr.f32.mxu0 0.0
    %1220 = vmatmul.mubr.f32.gmra.mrb[0].mxu0 %v1153
    %v1221 = vpop.f32.mrb[0].mxu0
    %v1222 = vadd.f32 0.0, %v1221
    %v1223 = vpop.f32.mrb[0].mxu0
    %1224 = vdwg.mxu0
    %1226 = vrot.lane.b32.xlu0 %v1222, 24
    %v1227 = vpop.permute.xlu0 %1226
    %vm1229 = vcmask 261312
    %1230 = vst.msk [vmem:[#allocation3] sm:$0xff] %vm1229, %v1227
    %v1232 = vsel %vm80, %v869, 0
    %1234 = vmatprep.subr.mxu0 0.0
    %1235 = vmatpush1.msra.mxu0 %v914
    %1236 = vmatprep.subr.mxu0 0.0
    %1237 = vmatpush1.msra.mxu0 %v915
    %1238 = vmatprep.subr.mxu0 0.0
    %1239 = vmatpush1.msra.mxu0 0.0
    %1240 = vmatprep.subr.mxu0 0.0
    %1241 = vmatpush1.msra.mxu0 0.0
    %1242 = vmatprep.subr.mxu0 0.0
    %1243 = vmatpush1.msra.mxu0 0.0
    %1244 = vmatprep.subr.mxu0 0.0
    %1245 = vmatpush1.msra.mxu0 0.0
    %1246 = vmatprep.subr.mxu0 0.0
    %1247 = vmatpush1.msra.mxu0 0.0
    %1248 = vmatprep.subr.mxu0 0.0
    %1249 = vmatpush1.msra.mxu0 0.0
    %1250 = vmatprep.subr.mxu0 0.0
    %1251 = vmatpush1.msra.mxu0 0.0
    %1252 = vmatprep.subr.mxu0 0.0
    %1253 = vmatpush1.msra.mxu0 0.0
    %1254 = vmatprep.subr.mxu0 0.0
    %1255 = vmatpush1.msra.mxu0 0.0
    %1256 = vmatprep.subr.mxu0 0.0
    %1257 = vmatpush1.msra.mxu0 0.0
    %1258 = vmatprep.subr.mxu0 0.0
    %1259 = vmatpush1.msra.mxu0 0.0
    %1260 = vmatprep.subr.mxu0 0.0
    %1261 = vmatpush1.msra.mxu0 0.0
    %1262 = vmatprep.subr.mxu0 0.0
    %1263 = vmatpush1.msra.mxu0 0.0
    %1264 = vmatprep.subr.mxu0 0.0
    %1265 = vmatpush1.msra.mxu0 0.0
    %1266 = vmatprep.subr.mxu0 0.0
    %1267 = vmatpush1.msra.mxu0 0.0
    %1268 = vmatprep.subr.mxu0 0.0
    %1269 = vmatpush1.msra.mxu0 0.0
    %1270 = vmatprep.subr.mxu0 0.0
    %1271 = vmatpush1.msra.mxu0 0.0
    %1272 = vmatprep.subr.mxu0 0.0
    %1273 = vmatpush1.msra.mxu0 0.0
    %1274 = vmatprep.subr.mxu0 0.0
    %1275 = vmatpush1.msra.mxu0 0.0
    %1276 = vmatprep.subr.mxu0 0.0
    %1277 = vmatpush1.msra.mxu0 0.0
    %1278 = vmatprep.subr.mxu0 0.0
    %1279 = vmatpush1.msra.mxu0 0.0
    %1280 = vmatprep.subr.mxu0 0.0
    %1281 = vmatpush1.msra.mxu0 0.0
    %1282 = vmatprep.subr.mxu0 0.0
    %1283 = vmatpush1.msra.mxu0 0.0
    %1284 = vmatprep.subr.mxu0 0.0
    %1285 = vmatpush1.msra.mxu0 0.0
    %1286 = vmatprep.subr.mxu0 0.0
    %1287 = vmatpush1.msra.mxu0 0.0
    %1288 = vmatprep.subr.mxu0 0.0
    %1289 = vmatpush1.msra.mxu0 0.0
    %1290 = vmatprep.subr.mxu0 0.0
    %1291 = vmatpush1.msra.mxu0 0.0
    %1292 = vmatprep.subr.mxu0 0.0
    %1293 = vmatpush1.msra.mxu0 0.0
    %1294 = vmatprep.subr.mxu0 0.0
    %1295 = vmatpush1.msra.mxu0 0.0
    %1296 = vmatprep.subr.mxu0 0.0
    %1297 = vmatpush1.msra.mxu0 0.0
    %1298 = vmatprep.mubr.f32.mxu0 0.0
    %1299 = vmatmul.mubr.f32.gmra.mrb[0].mxu0 %v1232
    %v1300 = vpop.f32.mrb[0].mxu0
    %v1301 = vadd.f32 0.0, %v1300
    %v1302 = vpop.f32.mrb[0].mxu0
    %1303 = vdwg.mxu0
    %1305 = vrot.lane.b32.xlu0 %v1301, 32
    %v1306 = vpop.permute.xlu0 %1305
    %vm1308 = vcmask 326912
    %1309 = vst.msk [vmem:[#allocation3] sm:$0xff] %vm1308, %v1306
    %1310 = vrot.lane.b32.xlu0 %v869, 96
    %v1311 = vpop.permute.xlu0 %1310
    %v1312 = vsel %vm80, %v1311, 0
    %1314 = vmatprep.subr.mxu0 0.0
    %1315 = vmatpush1.msra.mxu0 %v914
    %1316 = vmatprep.subr.mxu0 0.0
    %1317 = vmatpush1.msra.mxu0 %v915
    %1318 = vmatprep.subr.mxu0 0.0
    %1319 = vmatpush1.msra.mxu0 0.0
    %1320 = vmatprep.subr.mxu0 0.0
    %1321 = vmatpush1.msra.mxu0 0.0
    %1322 = vmatprep.subr.mxu0 0.0
    %1323 = vmatpush1.msra.mxu0 0.0
    %1324 = vmatprep.subr.mxu0 0.0
    %1325 = vmatpush1.msra.mxu0 0.0
    %1326 = vmatprep.subr.mxu0 0.0
    %1327 = vmatpush1.msra.mxu0 0.0
    %1328 = vmatprep.subr.mxu0 0.0
    %1329 = vmatpush1.msra.mxu0 0.0
    %1330 = vmatprep.subr.mxu0 0.0
    %1331 = vmatpush1.msra.mxu0 0.0
    %1332 = vmatprep.subr.mxu0 0.0
    %1333 = vmatpush1.msra.mxu0 0.0
    %1334 = vmatprep.subr.mxu0 0.0
    %1335 = vmatpush1.msra.mxu0 0.0
    %1336 = vmatprep.subr.mxu0 0.0
    %1337 = vmatpush1.msra.mxu0 0.0
    %1338 = vmatprep.subr.mxu0 0.0
    %1339 = vmatpush1.msra.mxu0 0.0
    %1340 = vmatprep.subr.mxu0 0.0
    %1341 = vmatpush1.msra.mxu0 0.0
    %1342 = vmatprep.subr.mxu0 0.0
    %1343 = vmatpush1.msra.mxu0 0.0
    %1344 = vmatprep.subr.mxu0 0.0
    %1345 = vmatpush1.msra.mxu0 0.0
    %1346 = vmatprep.subr.mxu0 0.0
    %1347 = vmatpush1.msra.mxu0 0.0
    %1348 = vmatprep.subr.mxu0 0.0
    %1349 = vmatpush1.msra.mxu0 0.0
    %1350 = vmatprep.subr.mxu0 0.0
    %1351 = vmatpush1.msra.mxu0 0.0
    %1352 = vmatprep.subr.mxu0 0.0
    %1353 = vmatpush1.msra.mxu0 0.0
    %1354 = vmatprep.subr.mxu0 0.0
    %1355 = vmatpush1.msra.mxu0 0.0
    %1356 = vmatprep.subr.mxu0 0.0
    %1357 = vmatpush1.msra.mxu0 0.0
    %1358 = vmatprep.subr.mxu0 0.0
    %1359 = vmatpush1.msra.mxu0 0.0
    %1360 = vmatprep.subr.mxu0 0.0
    %1361 = vmatpush1.msra.mxu0 0.0
    %1362 = vmatprep.subr.mxu0 0.0
    %1363 = vmatpush1.msra.mxu0 0.0
    %1364 = vmatprep.subr.mxu0 0.0
    %1365 = vmatpush1.msra.mxu0 0.0
    %1366 = vmatprep.subr.mxu0 0.0
    %1367 = vmatpush1.msra.mxu0 0.0
    %1368 = vmatprep.subr.mxu0 0.0
    %1369 = vmatpush1.msra.mxu0 0.0
    %1370 = vmatprep.subr.mxu0 0.0
    %1371 = vmatpush1.msra.mxu0 0.0
    %1372 = vmatprep.subr.mxu0 0.0
    %1373 = vmatpush1.msra.mxu0 0.0
    %1374 = vmatprep.subr.mxu0 0.0
    %1375 = vmatpush1.msra.mxu0 0.0
    %1376 = vmatprep.subr.mxu0 0.0
    %1377 = vmatpush1.msra.mxu0 0.0
    %1378 = vmatprep.mubr.f32.mxu0 0.0
    %1379 = vmatmul.mubr.f32.gmra.mrb[0].mxu0 %v1312
    %v1380 = vpop.f32.mrb[0].mxu0
    %v1381 = vadd.f32 0.0, %v1380
    %v1382 = vpop.f32.mrb[0].mxu0
    %1383 = vdwg.mxu0
    %1385 = vrot.lane.b32.xlu0 %v1381, 40
    %v1386 = vpop.permute.xlu0 %1385
    %vm1388 = vcmask 392512
    %1389 = vst.msk [vmem:[#allocation3] sm:$0xff] %vm1388, %v1386
    %1390 = vrot.lane.b32.xlu0 %v869, 64
    %v1391 = vpop.permute.xlu0 %1390
    %v1392 = vsel %vm80, %v1391, 0
    %1394 = vmatprep.subr.mxu0 0.0
    %1395 = vmatpush1.msra.mxu0 %v914
    %1396 = vmatprep.subr.mxu0 0.0
    %1397 = vmatpush1.msra.mxu0 %v915
    %1398 = vmatprep.subr.mxu0 0.0
    %1399 = vmatpush1.msra.mxu0 0.0
    %1400 = vmatprep.subr.mxu0 0.0
    %1401 = vmatpush1.msra.mxu0 0.0
    %1402 = vmatprep.subr.mxu0 0.0
    %1403 = vmatpush1.msra.mxu0 0.0
    %1404 = vmatprep.subr.mxu0 0.0
    %1405 = vmatpush1.msra.mxu0 0.0
    %1406 = vmatprep.subr.mxu0 0.0
    %1407 = vmatpush1.msra.mxu0 0.0
    %1408 = vmatprep.subr.mxu0 0.0
    %1409 = vmatpush1.msra.mxu0 0.0
    %1410 = vmatprep.subr.mxu0 0.0
    %1411 = vmatpush1.msra.mxu0 0.0
    %1412 = vmatprep.subr.mxu0 0.0
    %1413 = vmatpush1.msra.mxu0 0.0
    %1414 = vmatprep.subr.mxu0 0.0
    %1415 = vmatpush1.msra.mxu0 0.0
    %1416 = vmatprep.subr.mxu0 0.0
    %1417 = vmatpush1.msra.mxu0 0.0
    %1418 = vmatprep.subr.mxu0 0.0
    %1419 = vmatpush1.msra.mxu0 0.0
    %1420 = vmatprep.subr.mxu0 0.0
    %1421 = vmatpush1.msra.mxu0 0.0
    %1422 = vmatprep.subr.mxu0 0.0
    %1423 = vmatpush1.msra.mxu0 0.0
    %1424 = vmatprep.subr.mxu0 0.0
    %1425 = vmatpush1.msra.mxu0 0.0
    %1426 = vmatprep.subr.mxu0 0.0
    %1427 = vmatpush1.msra.mxu0 0.0
    %1428 = vmatprep.subr.mxu0 0.0
    %1429 = vmatpush1.msra.mxu0 0.0
    %1430 = vmatprep.subr.mxu0 0.0
    %1431 = vmatpush1.msra.mxu0 0.0
    %1432 = vmatprep.subr.mxu0 0.0
    %1433 = vmatpush1.msra.mxu0 0.0
    %1434 = vmatprep.subr.mxu0 0.0
    %1435 = vmatpush1.msra.mxu0 0.0
    %1436 = vmatprep.subr.mxu0 0.0
    %1437 = vmatpush1.msra.mxu0 0.0
    %1438 = vmatprep.subr.mxu0 0.0
    %1439 = vmatpush1.msra.mxu0 0.0
    %1440 = vmatprep.subr.mxu0 0.0
    %1441 = vmatpush1.msra.mxu0 0.0
    %1442 = vmatprep.subr.mxu0 0.0
    %1443 = vmatpush1.msra.mxu0 0.0
    %1444 = vmatprep.subr.mxu0 0.0
    %1445 = vmatpush1.msra.mxu0 0.0
    %1446 = vmatprep.subr.mxu0 0.0
    %1447 = vmatpush1.msra.mxu0 0.0
    %1448 = vmatprep.subr.mxu0 0.0
    %1449 = vmatpush1.msra.mxu0 0.0
    %1450 = vmatprep.subr.mxu0 0.0
    %1451 = vmatpush1.msra.mxu0 0.0
    %1452 = vmatprep.subr.mxu0 0.0
    %1453 = vmatpush1.msra.mxu0 0.0
    %1454 = vmatprep.subr.mxu0 0.0
    %1455 = vmatpush1.msra.mxu0 0.0
    %1456 = vmatprep.subr.mxu0 0.0
    %1457 = vmatpush1.msra.mxu0 0.0
    %1458 = vmatprep.mubr.f32.mxu0 0.0
    %1459 = vmatmul.mubr.f32.gmra.mrb[0].mxu0 %v1392
    %v1460 = vpop.f32.mrb[0].mxu0
    %v1461 = vadd.f32 0.0, %v1460
    %v1462 = vpop.f32.mrb[0].mxu0
    %1463 = vdwg.mxu0
    %1465 = vrot.lane.b32.xlu0 %v1461, 48
    %v1466 = vpop.permute.xlu0 %1465
    %vm1468 = vcmask 458112
    %1469 = vst.msk [vmem:[#allocation3] sm:$0xff] %vm1468, %v1466
    %1470 = vrot.lane.b32.xlu0 %v869, 32
    %v1471 = vpop.permute.xlu0 %1470
    %v1472 = vsel %vm80, %v1471, 0
    %1474 = vmatprep.subr.mxu0 0.0
    %1475 = vmatpush1.msra.mxu0 %v914
    %1476 = vmatprep.subr.mxu0 0.0
    %1477 = vmatpush1.msra.mxu0 %v915
    %1478 = vmatprep.subr.mxu0 0.0
    %1479 = vmatpush1.msra.mxu0 0.0
    %1480 = vmatprep.subr.mxu0 0.0
    %1481 = vmatpush1.msra.mxu0 0.0
    %1482 = vmatprep.subr.mxu0 0.0
    %1483 = vmatpush1.msra.mxu0 0.0
    %1484 = vmatprep.subr.mxu0 0.0
    %1485 = vmatpush1.msra.mxu0 0.0
    %1486 = vmatprep.subr.mxu0 0.0
    %1487 = vmatpush1.msra.mxu0 0.0
    %1488 = vmatprep.subr.mxu0 0.0
    %1489 = vmatpush1.msra.mxu0 0.0
    %1490 = vmatprep.subr.mxu0 0.0
    %1491 = vmatpush1.msra.mxu0 0.0
    %1492 = vmatprep.subr.mxu0 0.0
    %1493 = vmatpush1.msra.mxu0 0.0
    %1494 = vmatprep.subr.mxu0 0.0
    %1495 = vmatpush1.msra.mxu0 0.0
    %1496 = vmatprep.subr.mxu0 0.0
    %1497 = vmatpush1.msra.mxu0 0.0
    %1498 = vmatprep.subr.mxu0 0.0
    %1499 = vmatpush1.msra.mxu0 0.0
    %1500 = vmatprep.subr.mxu0 0.0
    %1501 = vmatpush1.msra.mxu0 0.0
    %1502 = vmatprep.subr.mxu0 0.0
    %1503 = vmatpush1.msra.mxu0 0.0
    %1504 = vmatprep.subr.mxu0 0.0
    %1505 = vmatpush1.msra.mxu0 0.0
    %1506 = vmatprep.subr.mxu0 0.0
    %1507 = vmatpush1.msra.mxu0 0.0
    %1508 = vmatprep.subr.mxu0 0.0
    %1509 = vmatpush1.msra.mxu0 0.0
    %1510 = vmatprep.subr.mxu0 0.0
    %1511 = vmatpush1.msra.mxu0 0.0
    %1512 = vmatprep.subr.mxu0 0.0
    %1513 = vmatpush1.msra.mxu0 0.0
    %1514 = vmatprep.subr.mxu0 0.0
    %1515 = vmatpush1.msra.mxu0 0.0
    %1516 = vmatprep.subr.mxu0 0.0
    %1517 = vmatpush1.msra.mxu0 0.0
    %1518 = vmatprep.subr.mxu0 0.0
    %1519 = vmatpush1.msra.mxu0 0.0
    %1520 = vmatprep.subr.mxu0 0.0
    %1521 = vmatpush1.msra.mxu0 0.0
    %1522 = vmatprep.subr.mxu0 0.0
    %1523 = vmatpush1.msra.mxu0 0.0
    %1524 = vmatprep.subr.mxu0 0.0
    %1525 = vmatpush1.msra.mxu0 0.0
    %1526 = vmatprep.subr.mxu0 0.0
    %1527 = vmatpush1.msra.mxu0 0.0
    %1528 = vmatprep.subr.mxu0 0.0
    %1529 = vmatpush1.msra.mxu0 0.0
    %1530 = vmatprep.subr.mxu0 0.0
    %1531 = vmatpush1.msra.mxu0 0.0
    %1532 = vmatprep.subr.mxu0 0.0
    %1533 = vmatpush1.msra.mxu0 0.0
    %1534 = vmatprep.subr.mxu0 0.0
    %1535 = vmatpush1.msra.mxu0 0.0
    %1536 = vmatprep.subr.mxu0 0.0
    %1537 = vmatpush1.msra.mxu0 0.0
    %1538 = vmatprep.mubr.f32.mxu0 0.0
    %1539 = vmatmul.mubr.f32.gmra.mrb[0].mxu0 %v1472
    %v1540 = vpop.f32.mrb[0].mxu0
    %v1541 = vadd.f32 0.0, %v1540
    %v1542 = vpop.f32.mrb[0].mxu0
    %1543 = vdwg.mxu0
    %1545 = vrot.lane.b32.xlu0 %v1541, 56
    %v1546 = vpop.permute.xlu0 %1545
    %vm1548 = vcmask 523712
    %1549 = vst.msk [vmem:[#allocation3] sm:$0xff] %vm1548, %v1546
    %v1551 = vsel %vm80, %v908, 0
    %1553 = vmatprep.subr.mxu0 0.0
    %1554 = vmatpush1.msra.mxu0 %v914
    %1555 = vmatprep.subr.mxu0 0.0
    %1556 = vmatpush1.msra.mxu0 %v915
    %1557 = vmatprep.subr.mxu0 0.0
    %1558 = vmatpush1.msra.mxu0 0.0
    %1559 = vmatprep.subr.mxu0 0.0
    %1560 = vmatpush1.msra.mxu0 0.0
    %1561 = vmatprep.subr.mxu0 0.0
    %1562 = vmatpush1.msra.mxu0 0.0
    %1563 = vmatprep.subr.mxu0 0.0
    %1564 = vmatpush1.msra.mxu0 0.0
    %1565 = vmatprep.subr.mxu0 0.0
    %1566 = vmatpush1.msra.mxu0 0.0
    %1567 = vmatprep.subr.mxu0 0.0
    %1568 = vmatpush1.msra.mxu0 0.0
    %1569 = vmatprep.subr.mxu0 0.0
    %1570 = vmatpush1.msra.mxu0 0.0
    %1571 = vmatprep.subr.mxu0 0.0
    %1572 = vmatpush1.msra.mxu0 0.0
    %1573 = vmatprep.subr.mxu0 0.0
    %1574 = vmatpush1.msra.mxu0 0.0
    %1575 = vmatprep.subr.mxu0 0.0
    %1576 = vmatpush1.msra.mxu0 0.0
    %1577 = vmatprep.subr.mxu0 0.0
    %1578 = vmatpush1.msra.mxu0 0.0
    %1579 = vmatprep.subr.mxu0 0.0
    %1580 = vmatpush1.msra.mxu0 0.0
    %1581 = vmatprep.subr.mxu0 0.0
    %1582 = vmatpush1.msra.mxu0 0.0
    %1583 = vmatprep.subr.mxu0 0.0
    %1584 = vmatpush1.msra.mxu0 0.0
    %1585 = vmatprep.subr.mxu0 0.0
    %1586 = vmatpush1.msra.mxu0 0.0
    %1587 = vmatprep.subr.mxu0 0.0
    %1588 = vmatpush1.msra.mxu0 0.0
    %1589 = vmatprep.subr.mxu0 0.0
    %1590 = vmatpush1.msra.mxu0 0.0
    %1591 = vmatprep.subr.mxu0 0.0
    %1592 = vmatpush1.msra.mxu0 0.0
    %1593 = vmatprep.subr.mxu0 0.0
    %1594 = vmatpush1.msra.mxu0 0.0
    %1595 = vmatprep.subr.mxu0 0.0
    %1596 = vmatpush1.msra.mxu0 0.0
    %1597 = vmatprep.subr.mxu0 0.0
    %1598 = vmatpush1.msra.mxu0 0.0
    %1599 = vmatprep.subr.mxu0 0.0
    %1600 = vmatpush1.msra.mxu0 0.0
    %1601 = vmatprep.subr.mxu0 0.0
    %1602 = vmatpush1.msra.mxu0 0.0
    %1603 = vmatprep.subr.mxu0 0.0
    %1604 = vmatpush1.msra.mxu0 0.0
    %1605 = vmatprep.subr.mxu0 0.0
    %1606 = vmatpush1.msra.mxu0 0.0
    %1607 = vmatprep.subr.mxu0 0.0
    %1608 = vmatpush1.msra.mxu0 0.0
    %1609 = vmatprep.subr.mxu0 0.0
    %1610 = vmatpush1.msra.mxu0 0.0
    %1611 = vmatprep.subr.mxu0 0.0
    %1612 = vmatpush1.msra.mxu0 0.0
    %1613 = vmatprep.subr.mxu0 0.0
    %1614 = vmatpush1.msra.mxu0 0.0
    %1615 = vmatprep.subr.mxu0 0.0
    %1616 = vmatpush1.msra.mxu0 0.0
    %1617 = vmatprep.mubr.f32.mxu0 0.0
    %1618 = vmatmul.mubr.f32.gmra.mrb[0].mxu0 %v1551
    %v1619 = vpop.f32.mrb[0].mxu0
    %v1620 = vadd.f32 0.0, %v1619
    %v1621 = vpop.f32.mrb[0].mxu0
    %1622 = vdwg.mxu0
    %1624 = vrot.lane.b32.xlu0 %v1620, 64
    %v1625 = vpop.permute.xlu0 %1624
    %vm1627 = vcmask 589312
    %1628 = vst.msk [vmem:[#allocation3] sm:$0xff] %vm1627, %v1625
    %1629 = vrot.lane.b32.xlu0 %v908, 96
    %v1630 = vpop.permute.xlu0 %1629
    %v1631 = vsel %vm80, %v1630, 0
    %1633 = vmatprep.subr.mxu0 0.0
    %1634 = vmatpush1.msra.mxu0 %v914
    %1635 = vmatprep.subr.mxu0 0.0
    %1636 = vmatpush1.msra.mxu0 %v915
    %1637 = vmatprep.subr.mxu0 0.0
    %1638 = vmatpush1.msra.mxu0 0.0
    %1639 = vmatprep.subr.mxu0 0.0
    %1640 = vmatpush1.msra.mxu0 0.0
    %1641 = vmatprep.subr.mxu0 0.0
    %1642 = vmatpush1.msra.mxu0 0.0
    %1643 = vmatprep.subr.mxu0 0.0
    %1644 = vmatpush1.msra.mxu0 0.0
    %1645 = vmatprep.subr.mxu0 0.0
    %1646 = vmatpush1.msra.mxu0 0.0
    %1647 = vmatprep.subr.mxu0 0.0
    %1648 = vmatpush1.msra.mxu0 0.0
    %1649 = vmatprep.subr.mxu0 0.0
    %1650 = vmatpush1.msra.mxu0 0.0
    %1651 = vmatprep.subr.mxu0 0.0
    %1652 = vmatpush1.msra.mxu0 0.0
    %1653 = vmatprep.subr.mxu0 0.0
    %1654 = vmatpush1.msra.mxu0 0.0
    %1655 = vmatprep.subr.mxu0 0.0
    %1656 = vmatpush1.msra.mxu0 0.0
    %1657 = vmatprep.subr.mxu0 0.0
    %1658 = vmatpush1.msra.mxu0 0.0
    %1659 = vmatprep.subr.mxu0 0.0
    %1660 = vmatpush1.msra.mxu0 0.0
    %1661 = vmatprep.subr.mxu0 0.0
    %1662 = vmatpush1.msra.mxu0 0.0
    %1663 = vmatprep.subr.mxu0 0.0
    %1664 = vmatpush1.msra.mxu0 0.0
    %1665 = vmatprep.subr.mxu0 0.0
    %1666 = vmatpush1.msra.mxu0 0.0
    %1667 = vmatprep.subr.mxu0 0.0
    %1668 = vmatpush1.msra.mxu0 0.0
    %1669 = vmatprep.subr.mxu0 0.0
    %1670 = vmatpush1.msra.mxu0 0.0
    %1671 = vmatprep.subr.mxu0 0.0
    %1672 = vmatpush1.msra.mxu0 0.0
    %1673 = vmatprep.subr.mxu0 0.0
    %1674 = vmatpush1.msra.mxu0 0.0
    %1675 = vmatprep.subr.mxu0 0.0
    %1676 = vmatpush1.msra.mxu0 0.0
    %1677 = vmatprep.subr.mxu0 0.0
    %1678 = vmatpush1.msra.mxu0 0.0
    %1679 = vmatprep.subr.mxu0 0.0
    %1680 = vmatpush1.msra.mxu0 0.0
    %1681 = vmatprep.subr.mxu0 0.0
    %1682 = vmatpush1.msra.mxu0 0.0
    %1683 = vmatprep.subr.mxu0 0.0
    %1684 = vmatpush1.msra.mxu0 0.0
    %1685 = vmatprep.subr.mxu0 0.0
    %1686 = vmatpush1.msra.mxu0 0.0
    %1687 = vmatprep.subr.mxu0 0.0
    %1688 = vmatpush1.msra.mxu0 0.0
    %1689 = vmatprep.subr.mxu0 0.0
    %1690 = vmatpush1.msra.mxu0 0.0
    %1691 = vmatprep.subr.mxu0 0.0
    %1692 = vmatpush1.msra.mxu0 0.0
    %1693 = vmatprep.subr.mxu0 0.0
    %1694 = vmatpush1.msra.mxu0 0.0
    %1695 = vmatprep.subr.mxu0 0.0
    %1696 = vmatpush1.msra.mxu0 0.0
    %1697 = vmatprep.mubr.f32.mxu0 0.0
    %1698 = vmatmul.mubr.f32.gmra.mrb[0].mxu0 %v1631
    %v1699 = vpop.f32.mrb[0].mxu0
    %v1700 = vadd.f32 0.0, %v1699
    %v1701 = vpop.f32.mrb[0].mxu0
    %1702 = vdwg.mxu0
    %1704 = vrot.lane.b32.xlu0 %v1700, 72
    %v1705 = vpop.permute.xlu0 %1704
    %vm1707 = vcmask 654912
    %1708 = vst.msk [vmem:[#allocation3] sm:$0xff] %vm1707, %v1705
    %1709 = vrot.lane.b32.xlu0 %v908, 64
    %v1710 = vpop.permute.xlu0 %1709
    %v1711 = vsel %vm80, %v1710, 0
    %1713 = vmatprep.subr.mxu0 0.0
    %1714 = vmatpush1.msra.mxu0 %v914
    %1715 = vmatprep.subr.mxu0 0.0
    %1716 = vmatpush1.msra.mxu0 %v915
    %1717 = vmatprep.subr.mxu0 0.0
    %1718 = vmatpush1.msra.mxu0 0.0
    %1719 = vmatprep.subr.mxu0 0.0
    %1720 = vmatpush1.msra.mxu0 0.0
    %1721 = vmatprep.subr.mxu0 0.0
    %1722 = vmatpush1.msra.mxu0 0.0
    %1723 = vmatprep.subr.mxu0 0.0
    %1724 = vmatpush1.msra.mxu0 0.0
    %1725 = vmatprep.subr.mxu0 0.0
    %1726 = vmatpush1.msra.mxu0 0.0
    %1727 = vmatprep.subr.mxu0 0.0
    %1728 = vmatpush1.msra.mxu0 0.0
    %1729 = vmatprep.subr.mxu0 0.0
    %1730 = vmatpush1.msra.mxu0 0.0
    %1731 = vmatprep.subr.mxu0 0.0
    %1732 = vmatpush1.msra.mxu0 0.0
    %1733 = vmatprep.subr.mxu0 0.0
    %1734 = vmatpush1.msra.mxu0 0.0
    %1735 = vmatprep.subr.mxu0 0.0
    %1736 = vmatpush1.msra.mxu0 0.0
    %1737 = vmatprep.subr.mxu0 0.0
    %1738 = vmatpush1.msra.mxu0 0.0
    %1739 = vmatprep.subr.mxu0 0.0
    %1740 = vmatpush1.msra.mxu0 0.0
    %1741 = vmatprep.subr.mxu0 0.0
    %1742 = vmatpush1.msra.mxu0 0.0
    %1743 = vmatprep.subr.mxu0 0.0
    %1744 = vmatpush1.msra.mxu0 0.0
    %1745 = vmatprep.subr.mxu0 0.0
    %1746 = vmatpush1.msra.mxu0 0.0
    %1747 = vmatprep.subr.mxu0 0.0
    %1748 = vmatpush1.msra.mxu0 0.0
    %1749 = vmatprep.subr.mxu0 0.0
    %1750 = vmatpush1.msra.mxu0 0.0
    %1751 = vmatprep.subr.mxu0 0.0
    %1752 = vmatpush1.msra.mxu0 0.0
    %1753 = vmatprep.subr.mxu0 0.0
    %1754 = vmatpush1.msra.mxu0 0.0
    %1755 = vmatprep.subr.mxu0 0.0
    %1756 = vmatpush1.msra.mxu0 0.0
    %1757 = vmatprep.subr.mxu0 0.0
    %1758 = vmatpush1.msra.mxu0 0.0
    %1759 = vmatprep.subr.mxu0 0.0
    %1760 = vmatpush1.msra.mxu0 0.0
    %1761 = vmatprep.subr.mxu0 0.0
    %1762 = vmatpush1.msra.mxu0 0.0
    %1763 = vmatprep.subr.mxu0 0.0
    %1764 = vmatpush1.msra.mxu0 0.0
    %1765 = vmatprep.subr.mxu0 0.0
    %1766 = vmatpush1.msra.mxu0 0.0
    %1767 = vmatprep.subr.mxu0 0.0
    %1768 = vmatpush1.msra.mxu0 0.0
    %1769 = vmatprep.subr.mxu0 0.0
    %1770 = vmatpush1.msra.mxu0 0.0
    %1771 = vmatprep.subr.mxu0 0.0
    %1772 = vmatpush1.msra.mxu0 0.0
    %1773 = vmatprep.subr.mxu0 0.0
    %1774 = vmatpush1.msra.mxu0 0.0
    %1775 = vmatprep.subr.mxu0 0.0
    %1776 = vmatpush1.msra.mxu0 0.0
    %1777 = vmatprep.mubr.f32.mxu0 0.0
    %1778 = vmatmul.mubr.f32.gmra.mrb[0].mxu0 %v1711
    %v1779 = vpop.f32.mrb[0].mxu0
    %v1780 = vadd.f32 0.0, %v1779
    %v1781 = vpop.f32.mrb[0].mxu0
    %1782 = vdwg.mxu0
    %1784 = vrot.lane.b32.xlu0 %v1780, 80
    %v1785 = vpop.permute.xlu0 %1784
    %vm1787 = vcmask 720512
    %1788 = vst.msk [vmem:[#allocation3] sm:$0xff] %vm1787, %v1785
    %1789 = vrot.lane.b32.xlu0 %v908, 32
    %v1790 = vpop.permute.xlu0 %1789
    %v1791 = vsel %vm80, %v1790, 0
    %1793 = vmatprep.subr.mxu0 0.0
    %1794 = vmatpush1.msra.mxu0 %v914
    %1795 = vmatprep.subr.mxu0 0.0
    %1796 = vmatpush1.msra.mxu0 %v915
    %1797 = vmatprep.subr.mxu0 0.0
    %1798 = vmatpush1.msra.mxu0 0.0
    %1799 = vmatprep.subr.mxu0 0.0
    %1800 = vmatpush1.msra.mxu0 0.0
    %1801 = vmatprep.subr.mxu0 0.0
    %1802 = vmatpush1.msra.mxu0 0.0
    %1803 = vmatprep.subr.mxu0 0.0
    %1804 = vmatpush1.msra.mxu0 0.0
    %1805 = vmatprep.subr.mxu0 0.0
    %1806 = vmatpush1.msra.mxu0 0.0
    %1807 = vmatprep.subr.mxu0 0.0
    %1808 = vmatpush1.msra.mxu0 0.0
    %1809 = vmatprep.subr.mxu0 0.0
    %1810 = vmatpush1.msra.mxu0 0.0
    %1811 = vmatprep.subr.mxu0 0.0
    %1812 = vmatpush1.msra.mxu0 0.0
    %1813 = vmatprep.subr.mxu0 0.0
    %1814 = vmatpush1.msra.mxu0 0.0
    %1815 = vmatprep.subr.mxu0 0.0
    %1816 = vmatpush1.msra.mxu0 0.0
    %1817 = vmatprep.subr.mxu0 0.0
    %1818 = vmatpush1.msra.mxu0 0.0
    %1819 = vmatprep.subr.mxu0 0.0
    %1820 = vmatpush1.msra.mxu0 0.0
    %1821 = vmatprep.subr.mxu0 0.0
    %1822 = vmatpush1.msra.mxu0 0.0
    %1823 = vmatprep.subr.mxu0 0.0
    %1824 = vmatpush1.msra.mxu0 0.0
    %1825 = vmatprep.subr.mxu0 0.0
    %1826 = vmatpush1.msra.mxu0 0.0
    %1827 = vmatprep.subr.mxu0 0.0
    %1828 = vmatpush1.msra.mxu0 0.0
    %1829 = vmatprep.subr.mxu0 0.0
    %1830 = vmatpush1.msra.mxu0 0.0
    %1831 = vmatprep.subr.mxu0 0.0
    %1832 = vmatpush1.msra.mxu0 0.0
    %1833 = vmatprep.subr.mxu0 0.0
    %1834 = vmatpush1.msra.mxu0 0.0
    %1835 = vmatprep.subr.mxu0 0.0
    %1836 = vmatpush1.msra.mxu0 0.0
    %1837 = vmatprep.subr.mxu0 0.0
    %1838 = vmatpush1.msra.mxu0 0.0
    %1839 = vmatprep.subr.mxu0 0.0
    %1840 = vmatpush1.msra.mxu0 0.0
    %1841 = vmatprep.subr.mxu0 0.0
    %1842 = vmatpush1.msra.mxu0 0.0
    %1843 = vmatprep.subr.mxu0 0.0
    %1844 = vmatpush1.msra.mxu0 0.0
    %1845 = vmatprep.subr.mxu0 0.0
    %1846 = vmatpush1.msra.mxu0 0.0
    %1847 = vmatprep.subr.mxu0 0.0
    %1848 = vmatpush1.msra.mxu0 0.0
    %1849 = vmatprep.subr.mxu0 0.0
    %1850 = vmatpush1.msra.mxu0 0.0
    %1851 = vmatprep.subr.mxu0 0.0
    %1852 = vmatpush1.msra.mxu0 0.0
    %1853 = vmatprep.subr.mxu0 0.0
    %1854 = vmatpush1.msra.mxu0 0.0
    %1855 = vmatprep.subr.mxu0 0.0
    %1856 = vmatpush1.msra.mxu0 0.0
    %1857 = vmatprep.mubr.f32.mxu0 0.0
    %1858 = vmatmul.mubr.f32.gmra.mrb[0].mxu0 %v1791
    %v1859 = vpop.f32.mrb[0].mxu0
    %v1860 = vadd.f32 0.0, %v1859
    %v1861 = vpop.f32.mrb[0].mxu0
    %1862 = vdwg.mxu0
    %1864 = vrot.lane.b32.xlu0 %v1860, 88
    %v1865 = vpop.permute.xlu0 %1864
    %vm1867 = vcmask 786112
    %1868 = vst.msk [vmem:[#allocation3] sm:$0xff] %vm1867, %v1865
    %v1870 = vsel %vm80, %v910, 0
    %1872 = vmatprep.subr.mxu0 0.0
    %1873 = vmatpush1.msra.mxu0 %v914
    %1874 = vmatprep.subr.mxu0 0.0
    %1875 = vmatpush1.msra.mxu0 %v915
    %1876 = vmatprep.subr.mxu0 0.0
    %1877 = vmatpush1.msra.mxu0 0.0
    %1878 = vmatprep.subr.mxu0 0.0
    %1879 = vmatpush1.msra.mxu0 0.0
    %1880 = vmatprep.subr.mxu0 0.0
    %1881 = vmatpush1.msra.mxu0 0.0
    %1882 = vmatprep.subr.mxu0 0.0
    %1883 = vmatpush1.msra.mxu0 0.0
    %1884 = vmatprep.subr.mxu0 0.0
    %1885 = vmatpush1.msra.mxu0 0.0
    %1886 = vmatprep.subr.mxu0 0.0
    %1887 = vmatpush1.msra.mxu0 0.0
    %1888 = vmatprep.subr.mxu0 0.0
    %1889 = vmatpush1.msra.mxu0 0.0
    %1890 = vmatprep.subr.mxu0 0.0
    %1891 = vmatpush1.msra.mxu0 0.0
    %1892 = vmatprep.subr.mxu0 0.0
    %1893 = vmatpush1.msra.mxu0 0.0
    %1894 = vmatprep.subr.mxu0 0.0
    %1895 = vmatpush1.msra.mxu0 0.0
    %1896 = vmatprep.subr.mxu0 0.0
    %1897 = vmatpush1.msra.mxu0 0.0
    %1898 = vmatprep.subr.mxu0 0.0
    %1899 = vmatpush1.msra.mxu0 0.0
    %1900 = vmatprep.subr.mxu0 0.0
    %1901 = vmatpush1.msra.mxu0 0.0
    %1902 = vmatprep.subr.mxu0 0.0
    %1903 = vmatpush1.msra.mxu0 0.0
    %1904 = vmatprep.subr.mxu0 0.0
    %1905 = vmatpush1.msra.mxu0 0.0
    %1906 = vmatprep.subr.mxu0 0.0
    %1907 = vmatpush1.msra.mxu0 0.0
    %1908 = vmatprep.subr.mxu0 0.0
    %1909 = vmatpush1.msra.mxu0 0.0
    %1910 = vmatprep.subr.mxu0 0.0
    %1911 = vmatpush1.msra.mxu0 0.0
    %1912 = vmatprep.subr.mxu0 0.0
    %1913 = vmatpush1.msra.mxu0 0.0
    %1914 = vmatprep.subr.mxu0 0.0
    %1915 = vmatpush1.msra.mxu0 0.0
    %1916 = vmatprep.subr.mxu0 0.0
    %1917 = vmatpush1.msra.mxu0 0.0
    %1918 = vmatprep.subr.mxu0 0.0
    %1919 = vmatpush1.msra.mxu0 0.0
    %1920 = vmatprep.subr.mxu0 0.0
    %1921 = vmatpush1.msra.mxu0 0.0
    %1922 = vmatprep.subr.mxu0 0.0
    %1923 = vmatpush1.msra.mxu0 0.0
    %1924 = vmatprep.subr.mxu0 0.0
    %1925 = vmatpush1.msra.mxu0 0.0
    %1926 = vmatprep.subr.mxu0 0.0
    %1927 = vmatpush1.msra.mxu0 0.0
    %1928 = vmatprep.subr.mxu0 0.0
    %1929 = vmatpush1.msra.mxu0 0.0
    %1930 = vmatprep.subr.mxu0 0.0
    %1931 = vmatpush1.msra.mxu0 0.0
    %1932 = vmatprep.subr.mxu0 0.0
    %1933 = vmatpush1.msra.mxu0 0.0
    %1934 = vmatprep.subr.mxu0 0.0
    %1935 = vmatpush1.msra.mxu0 0.0
    %1936 = vmatprep.mubr.f32.mxu0 0.0
    %1937 = vmatmul.mubr.f32.gmra.mrb[0].mxu0 %v1870
    %v1938 = vpop.f32.mrb[0].mxu0
    %v1939 = vadd.f32 0.0, %v1938
    %v1940 = vpop.f32.mrb[0].mxu0
    %1941 = vdwg.mxu0
    %1943 = vrot.lane.b32.xlu0 %v1939, 96
    %v1944 = vpop.permute.xlu0 %1943
    %vm1946 = vcmask 851712
    %1947 = vst.msk [vmem:[#allocation3] sm:$0xff] %vm1946, %v1944
    %1948 = vrot.lane.b32.xlu0 %v910, 96
    %v1949 = vpop.permute.xlu0 %1948
    %v1950 = vsel %vm80, %v1949, 0
    %1952 = vmatprep.subr.mxu0 0.0
    %1953 = vmatpush1.msra.mxu0 %v914
    %1954 = vmatprep.subr.mxu0 0.0
    %1955 = vmatpush1.msra.mxu0 %v915
    %1956 = vmatprep.subr.mxu0 0.0
    %1957 = vmatpush1.msra.mxu0 0.0
    %1958 = vmatprep.subr.mxu0 0.0
    %1959 = vmatpush1.msra.mxu0 0.0
    %1960 = vmatprep.subr.mxu0 0.0
    %1961 = vmatpush1.msra.mxu0 0.0
    %1962 = vmatprep.subr.mxu0 0.0
    %1963 = vmatpush1.msra.mxu0 0.0
    %1964 = vmatprep.subr.mxu0 0.0
    %1965 = vmatpush1.msra.mxu0 0.0
    %1966 = vmatprep.subr.mxu0 0.0
    %1967 = vmatpush1.msra.mxu0 0.0
    %1968 = vmatprep.subr.mxu0 0.0
    %1969 = vmatpush1.msra.mxu0 0.0
    %1970 = vmatprep.subr.mxu0 0.0
    %1971 = vmatpush1.msra.mxu0 0.0
    %1972 = vmatprep.subr.mxu0 0.0
    %1973 = vmatpush1.msra.mxu0 0.0
    %1974 = vmatprep.subr.mxu0 0.0
    %1975 = vmatpush1.msra.mxu0 0.0
    %1976 = vmatprep.subr.mxu0 0.0
    %1977 = vmatpush1.msra.mxu0 0.0
    %1978 = vmatprep.subr.mxu0 0.0
    %1979 = vmatpush1.msra.mxu0 0.0
    %1980 = vmatprep.subr.mxu0 0.0
    %1981 = vmatpush1.msra.mxu0 0.0
    %1982 = vmatprep.subr.mxu0 0.0
    %1983 = vmatpush1.msra.mxu0 0.0
    %1984 = vmatprep.subr.mxu0 0.0
    %1985 = vmatpush1.msra.mxu0 0.0
    %1986 = vmatprep.subr.mxu0 0.0
    %1987 = vmatpush1.msra.mxu0 0.0
    %1988 = vmatprep.subr.mxu0 0.0
    %1989 = vmatpush1.msra.mxu0 0.0
    %1990 = vmatprep.subr.mxu0 0.0
    %1991 = vmatpush1.msra.mxu0 0.0
    %1992 = vmatprep.subr.mxu0 0.0
    %1993 = vmatpush1.msra.mxu0 0.0
    %1994 = vmatprep.subr.mxu0 0.0
    %1995 = vmatpush1.msra.mxu0 0.0
    %1996 = vmatprep.subr.mxu0 0.0
    %1997 = vmatpush1.msra.mxu0 0.0
    %1998 = vmatprep.subr.mxu0 0.0
    %1999 = vmatpush1.msra.mxu0 0.0
    %2000 = vmatprep.subr.mxu0 0.0
    %2001 = vmatpush1.msra.mxu0 0.0
    %2002 = vmatprep.subr.mxu0 0.0
    %2003 = vmatpush1.msra.mxu0 0.0
    %2004 = vmatprep.subr.mxu0 0.0
    %2005 = vmatpush1.msra.mxu0 0.0
    %2006 = vmatprep.subr.mxu0 0.0
    %2007 = vmatpush1.msra.mxu0 0.0
    %2008 = vmatprep.subr.mxu0 0.0
    %2009 = vmatpush1.msra.mxu0 0.0
    %2010 = vmatprep.subr.mxu0 0.0
    %2011 = vmatpush1.msra.mxu0 0.0
    %2012 = vmatprep.subr.mxu0 0.0
    %2013 = vmatpush1.msra.mxu0 0.0
    %2014 = vmatprep.subr.mxu0 0.0
    %2015 = vmatpush1.msra.mxu0 0.0
    %2016 = vmatprep.mubr.f32.mxu0 0.0
    %2017 = vmatmul.mubr.f32.gmra.mrb[0].mxu0 %v1950
    %v2018 = vpop.f32.mrb[0].mxu0
    %v2019 = vadd.f32 0.0, %v2018
    %v2020 = vpop.f32.mrb[0].mxu0
    %2021 = vdwg.mxu0
    %2023 = vrot.lane.b32.xlu0 %v2019, 104
    %v2024 = vpop.permute.xlu0 %2023
    %vm2026 = vcmask 917312
    %2027 = vst.msk [vmem:[#allocation3] sm:$0xff] %vm2026, %v2024
    %2028 = vrot.lane.b32.xlu0 %v910, 64
    %v2029 = vpop.permute.xlu0 %2028
    %v2030 = vsel %vm80, %v2029, 0
    %2032 = vmatprep.subr.mxu0 0.0
    %2033 = vmatpush1.msra.mxu0 %v914
    %2034 = vmatprep.subr.mxu0 0.0
    %2035 = vmatpush1.msra.mxu0 %v915
    %2036 = vmatprep.subr.mxu0 0.0
    %2037 = vmatpush1.msra.mxu0 0.0
    %2038 = vmatprep.subr.mxu0 0.0
    %2039 = vmatpush1.msra.mxu0 0.0
    %2040 = vmatprep.subr.mxu0 0.0
    %2041 = vmatpush1.msra.mxu0 0.0
    %2042 = vmatprep.subr.mxu0 0.0
    %2043 = vmatpush1.msra.mxu0 0.0
    %2044 = vmatprep.subr.mxu0 0.0
    %2045 = vmatpush1.msra.mxu0 0.0
    %2046 = vmatprep.subr.mxu0 0.0
    %2047 = vmatpush1.msra.mxu0 0.0
    %2048 = vmatprep.subr.mxu0 0.0
    %2049 = vmatpush1.msra.mxu0 0.0
    %2050 = vmatprep.subr.mxu0 0.0
    %2051 = vmatpush1.msra.mxu0 0.0
    %2052 = vmatprep.subr.mxu0 0.0
    %2053 = vmatpush1.msra.mxu0 0.0
    %2054 = vmatprep.subr.mxu0 0.0
    %2055 = vmatpush1.msra.mxu0 0.0
    %2056 = vmatprep.subr.mxu0 0.0
    %2057 = vmatpush1.msra.mxu0 0.0
    %2058 = vmatprep.subr.mxu0 0.0
    %2059 = vmatpush1.msra.mxu0 0.0
    %2060 = vmatprep.subr.mxu0 0.0
    %2061 = vmatpush1.msra.mxu0 0.0
    %2062 = vmatprep.subr.mxu0 0.0
    %2063 = vmatpush1.msra.mxu0 0.0
    %2064 = vmatprep.subr.mxu0 0.0
    %2065 = vmatpush1.msra.mxu0 0.0
    %2066 = vmatprep.subr.mxu0 0.0
    %2067 = vmatpush1.msra.mxu0 0.0
    %2068 = vmatprep.subr.mxu0 0.0
    %2069 = vmatpush1.msra.mxu0 0.0
    %2070 = vmatprep.subr.mxu0 0.0
    %2071 = vmatpush1.msra.mxu0 0.0
    %2072 = vmatprep.subr.mxu0 0.0
    %2073 = vmatpush1.msra.mxu0 0.0
    %2074 = vmatprep.subr.mxu0 0.0
    %2075 = vmatpush1.msra.mxu0 0.0
    %2076 = vmatprep.subr.mxu0 0.0
    %2077 = vmatpush1.msra.mxu0 0.0
    %2078 = vmatprep.subr.mxu0 0.0
    %2079 = vmatpush1.msra.mxu0 0.0
    %2080 = vmatprep.subr.mxu0 0.0
    %2081 = vmatpush1.msra.mxu0 0.0
    %2082 = vmatprep.subr.mxu0 0.0
    %2083 = vmatpush1.msra.mxu0 0.0
    %2084 = vmatprep.subr.mxu0 0.0
    %2085 = vmatpush1.msra.mxu0 0.0
    %2086 = vmatprep.subr.mxu0 0.0
    %2087 = vmatpush1.msra.mxu0 0.0
    %2088 = vmatprep.subr.mxu0 0.0
    %2089 = vmatpush1.msra.mxu0 0.0
    %2090 = vmatprep.subr.mxu0 0.0
    %2091 = vmatpush1.msra.mxu0 0.0
    %2092 = vmatprep.subr.mxu0 0.0
    %2093 = vmatpush1.msra.mxu0 0.0
    %2094 = vmatprep.subr.mxu0 0.0
    %2095 = vmatpush1.msra.mxu0 0.0
    %2096 = vmatprep.mubr.f32.mxu0 0.0
    %2097 = vmatmul.mubr.f32.gmra.mrb[0].mxu0 %v2030
    %v2098 = vpop.f32.mrb[0].mxu0
    %v2099 = vadd.f32 0.0, %v2098
    %v2100 = vpop.f32.mrb[0].mxu0
    %2101 = vdwg.mxu0
    %2103 = vrot.lane.b32.xlu0 %v2099, 112
    %v2104 = vpop.permute.xlu0 %2103
    %vm2106 = vcmask 982912
    %2107 = vst.msk [vmem:[#allocation3] sm:$0xff] %vm2106, %v2104
    %2108 = vrot.lane.b32.xlu0 %v910, 32
    %v2109 = vpop.permute.xlu0 %2108
    %v2110 = vsel %vm80, %v2109, 0
    %2112 = vmatprep.subr.mxu0 0.0
    %2113 = vmatpush1.msra.mxu0 %v914
    %2114 = vmatprep.subr.mxu0 0.0
    %2115 = vmatpush1.msra.mxu0 %v915
    %2116 = vmatprep.subr.mxu0 0.0
    %2117 = vmatpush1.msra.mxu0 0.0
    %2118 = vmatprep.subr.mxu0 0.0
    %2119 = vmatpush1.msra.mxu0 0.0
    %2120 = vmatprep.subr.mxu0 0.0
    %2121 = vmatpush1.msra.mxu0 0.0
    %2122 = vmatprep.subr.mxu0 0.0
    %2123 = vmatpush1.msra.mxu0 0.0
    %2124 = vmatprep.subr.mxu0 0.0
    %2125 = vmatpush1.msra.mxu0 0.0
    %2126 = vmatprep.subr.mxu0 0.0
    %2127 = vmatpush1.msra.mxu0 0.0
    %2128 = vmatprep.subr.mxu0 0.0
    %2129 = vmatpush1.msra.mxu0 0.0
    %2130 = vmatprep.subr.mxu0 0.0
    %2131 = vmatpush1.msra.mxu0 0.0
    %2132 = vmatprep.subr.mxu0 0.0
    %2133 = vmatpush1.msra.mxu0 0.0
    %2134 = vmatprep.subr.mxu0 0.0
    %2135 = vmatpush1.msra.mxu0 0.0
    %2136 = vmatprep.subr.mxu0 0.0
    %2137 = vmatpush1.msra.mxu0 0.0
    %2138 = vmatprep.subr.mxu0 0.0
    %2139 = vmatpush1.msra.mxu0 0.0
    %2140 = vmatprep.subr.mxu0 0.0
    %2141 = vmatpush1.msra.mxu0 0.0
    %2142 = vmatprep.subr.mxu0 0.0
    %2143 = vmatpush1.msra.mxu0 0.0
    %2144 = vmatprep.subr.mxu0 0.0
    %2145 = vmatpush1.msra.mxu0 0.0
    %2146 = vmatprep.subr.mxu0 0.0
    %2147 = vmatpush1.msra.mxu0 0.0
    %2148 = vmatprep.subr.mxu0 0.0
    %2149 = vmatpush1.msra.mxu0 0.0
    %2150 = vmatprep.subr.mxu0 0.0
    %2151 = vmatpush1.msra.mxu0 0.0
    %2152 = vmatprep.subr.mxu0 0.0
    %2153 = vmatpush1.msra.mxu0 0.0
    %2154 = vmatprep.subr.mxu0 0.0
    %2155 = vmatpush1.msra.mxu0 0.0
    %2156 = vmatprep.subr.mxu0 0.0
    %2157 = vmatpush1.msra.mxu0 0.0
    %2158 = vmatprep.subr.mxu0 0.0
    %2159 = vmatpush1.msra.mxu0 0.0
    %2160 = vmatprep.subr.mxu0 0.0
    %2161 = vmatpush1.msra.mxu0 0.0
    %2162 = vmatprep.subr.mxu0 0.0
    %2163 = vmatpush1.msra.mxu0 0.0
    %2164 = vmatprep.subr.mxu0 0.0
    %2165 = vmatpush1.msra.mxu0 0.0
    %2166 = vmatprep.subr.mxu0 0.0
    %2167 = vmatpush1.msra.mxu0 0.0
    %2168 = vmatprep.subr.mxu0 0.0
    %2169 = vmatpush1.msra.mxu0 0.0
    %2170 = vmatprep.subr.mxu0 0.0
    %2171 = vmatpush1.msra.mxu0 0.0
    %2172 = vmatprep.subr.mxu0 0.0
    %2173 = vmatpush1.msra.mxu0 0.0
    %2174 = vmatprep.subr.mxu0 0.0
    %2175 = vmatpush1.msra.mxu0 0.0
    %2176 = vmatprep.mubr.f32.mxu0 0.0
    %2177 = vmatmul.mubr.f32.gmra.mrb[0].mxu0 %v2110
    %v2178 = vpop.f32.mrb[0].mxu0
    %v2179 = vadd.f32 0.0, %v2178
    %v2180 = vpop.f32.mrb[0].mxu0
    %2181 = vdwg.mxu0
    %2183 = vrot.lane.b32.xlu0 %v2179, 120
    %v2184 = vpop.permute.xlu0 %2183
    %vm2186 = vcmask 1048512
    %2187 = vst.msk [vmem:[#allocation3] sm:$0xff] %vm2186, %v2184
    %v2188 = vld [vmem:[#allocation3] sm:$0xff]
    %v2189 = vld [vmem:[%s10] sm:$0xff]
    %v2190 = vld [vmem:[%s11] sm:$0xff]
    %2191 = vadd.xlane.f32.xlu0 %v2188
    %v2192 = vpop.xlane.xlu0 %2191
    %v2193 = vmul.f32 %v2192, 0.0078125
    %v2194 = vsub.f32 %v2188, %v2193
    %v2195 = vmul.f32 %v2194, %v2194
    %2196 = vadd.xlane.f32.xlu0 %v2195
    %v2197 = vpop.xlane.xlu0 %2196
    %v2198 = vmul.f32 %v2197, 0.0078125
    %v2199 = vadd.f32 %v2198, 1e-05
    %v2200 = vrsqrt.pop %v2199
    %v2201 = vmul.f32 %v2189, %v2200
    %v2202 = vmul.f32 %v2193, %v2201
    %v2203 = vsub.f32 %v2190, %v2202
    %2205 = vset.pattern.permute.xlu0 0
    %2206 = vperm.xlu0 %2205, %v2201
    %v2207 = vpop.permute.xlu0 %2206
    %v2209 = vmul.f32 %v2188, %v2207
    %2211 = vset.pattern.permute.xlu0 0
    %2212 = vperm.xlu0 %2211, %v2203
    %v2213 = vpop.permute.xlu0 %2212
    %v2215 = vadd.f32 %v2209, %v2213
    %v2216 = vmax.f32 %v2215, 0.0
    %v2217 = vld [vmem:[%s4] sm:$0xf]
    %v2218 = vld [vmem:[%s4 + $0x4] sm:$0xf]
    %v2219 = vld [vmem:[%s4 + $0x8] sm:$0xf]
    %v2220 = vld [vmem:[%s4 + $0xc] sm:$0xf]
    %v2221 = vpack.c.bf16 %v2216, %v2216
    %v2226 = vunpack.c.l.b16 %v2217
    %v2227 = vunpack.c.l.b16 %v2218
    %v2228 = vunpack.c.l.b16 %v2219
    %v2229 = vunpack.c.l.b16 %v2220
    %v2230 = vpack.c.b16 %v2227, %v2226
    %v2231 = vpack.c.b16 %v2229, %v2228
    %v2233 = vsel %vm989, %v2230, 0
    %v2236 = vsel %vm989, %v2231, 0
    %v2239 = vsel %vm819, %v2221, 0
    %2241 = vmatprep.subr.bf16.mxu0 0
    %2242 = vmatpush1.bf16.msra.mxu0 %v2239
    %2243 = vmatprep.subr.bf16.mxu0 0
    %2244 = vmatpush1.bf16.msra.mxu0 0
    %2245 = vmatprep.subr.bf16.mxu0 0
    %2246 = vmatpush1.bf16.msra.mxu0 0
    %2247 = vmatprep.subr.bf16.mxu0 0
    %2248 = vmatpush1.bf16.msra.mxu0 0
    %2249 = vmatprep.subr.bf16.mxu0 0
    %2250 = vmatpush1.bf16.msra.mxu0 0
    %2251 = vmatprep.subr.bf16.mxu0 0
    %2252 = vmatpush1.bf16.msra.mxu0 0
    %2253 = vmatprep.subr.bf16.mxu0 0
    %2254 = vmatpush1.bf16.msra.mxu0 0
    %2255 = vmatprep.subr.bf16.mxu0 0
    %2256 = vmatpush1.bf16.msra.mxu0 0
    %2257 = vmatprep.subr.bf16.mxu0 0
    %2258 = vmatpush1.bf16.msra.mxu0 0
    %2259 = vmatprep.subr.bf16.mxu0 0
    %2260 = vmatpush1.bf16.msra.mxu0 0
    %2261 = vmatprep.subr.bf16.mxu0 0
    %2262 = vmatpush1.bf16.msra.mxu0 0
    %2263 = vmatprep.subr.bf16.mxu0 0
    %2264 = vmatpush1.bf16.msra.mxu0 0
    %2265 = vmatprep.subr.bf16.mxu0 0
    %2266 = vmatpush1.bf16.msra.mxu0 0
    %2267 = vmatprep.subr.bf16.mxu0 0
    %2268 = vmatpush1.bf16.msra.mxu0 0
    %2269 = vmatprep.subr.bf16.mxu0 0
    %2270 = vmatpush1.bf16.msra.mxu0 0
    %2271 = vmatprep.subr.bf16.mxu0 0
    %2272 = vmatpush1.bf16.msra.mxu0 0
    %2273 = vmatprep.mubr.bf16.mxu0 0
    %2274 = vmatmul.mubr.bf16.gmra.mrb[0].mxu0 %v2233
    %v2275 = vpop.f32.mrb[0].mxu0
    %v2276 = vadd.f32 0.0, %v2275
    %v2277 = vpop.f32.mrb[0].mxu0
    %v2278 = vpop.f32.mrb[0].mxu0
    %v2279 = vadd.f32 0.0, %v2278
    %v2280 = vpop.f32.mrb[0].mxu0
    %2281 = vmatprep.mubr.bf16.mxu0 0
    %2282 = vmatmul.mubr.bf16.gmra.mrb[0].mxu0 %v2236
    %v2283 = vpop.f32.mrb[0].mxu0
    %v2284 = vadd.f32 0.0, %v2283
    %v2285 = vpop.f32.mrb[0].mxu0
    %v2286 = vpop.f32.mrb[0].mxu0
    %v2287 = vadd.f32 0.0, %v2286
    %v2288 = vpop.f32.mrb[0].mxu0
    %2289 = vdwg.mxu0
    %v2290 = vld [vmem:[%s12] sm:$0xff]
    %v2291 = vld [vmem:[%s12 + $0x8] sm:$0xff]
    %v2292 = vld [vmem:[%s12 + $0x10] sm:$0xff]
    %v2293 = vld [vmem:[%s12 + $0x18] sm:$0xff]
    %v2294 = vld [vmem:[%s13] sm:$0xff]
    %v2295 = vld [vmem:[%s13 + $0x8] sm:$0xff]
    %v2296 = vld [vmem:[%s13 + $0x10] sm:$0xff]
    %v2297 = vld [vmem:[%s13 + $0x18] sm:$0xff]
    %2298 = vadd.xlane.f32.xlu0 %v2276
    %v2299 = vpop.xlane.xlu0 %2298
    %2300 = vadd.xlane.f32.xlu0 %v2279
    %v2301 = vpop.xlane.xlu0 %2300
    %2302 = vadd.xlane.f32.xlu0 %v2284
    %v2303 = vpop.xlane.xlu0 %2302
    %2304 = vadd.xlane.f32.xlu0 %v2287
    %v2305 = vpop.xlane.xlu0 %2304
    %v2306 = vmul.f32 %v2299, 0.0078125
    %v2307 = vmul.f32 %v2301, 0.0078125
    %v2308 = vmul.f32 %v2303, 0.0078125
    %v2309 = vmul.f32 %v2305, 0.0078125
    %v2310 = vsub.f32 %v2276, %v2306
    %v2311 = vsub.f32 %v2279, %v2307
    %v2312 = vsub.f32 %v2284, %v2308
    %v2313 = vsub.f32 %v2287, %v2309
    %v2314 = vmul.f32 %v2310, %v2310
    %v2315 = vmul.f32 %v2311, %v2311
    %v2316 = vmul.f32 %v2312, %v2312
    %v2317 = vmul.f32 %v2313, %v2313
    %2318 = vadd.xlane.f32.xlu0 %v2314
    %v2319 = vpop.xlane.xlu0 %2318
    %2320 = vadd.xlane.f32.xlu0 %v2315
    %v2321 = vpop.xlane.xlu0 %2320
    %2322 = vadd.xlane.f32.xlu0 %v2316
    %v2323 = vpop.xlane.xlu0 %2322
    %2324 = vadd.xlane.f32.xlu0 %v2317
    %v2325 = vpop.xlane.xlu0 %2324
    %v2326 = vmul.f32 %v2319, 0.0078125
    %v2327 = vmul.f32 %v2321, 0.0078125
    %v2328 = vmul.f32 %v2323, 0.0078125
    %v2329 = vmul.f32 %v2325, 0.0078125
    %v2330 = vadd.f32 %v2326, 1e-05
    %v2331 = vadd.f32 %v2327, 1e-05
    %v2332 = vadd.f32 %v2328, 1e-05
    %v2333 = vadd.f32 %v2329, 1e-05
    %v2334 = vrsqrt.pop %v2330
    %v2335 = vrsqrt.pop %v2331
    %v2336 = vrsqrt.pop %v2332
    %v2337 = vrsqrt.pop %v2333
    %v2338 = vmul.f32 %v2290, %v2334
    %v2339 = vmul.f32 %v2291, %v2335
    %v2340 = vmul.f32 %v2292, %v2336
    %v2341 = vmul.f32 %v2293, %v2337
    %v2342 = vmul.f32 %v2306, %v2338
    %v2343 = vmul.f32 %v2307, %v2339
    %v2344 = vmul.f32 %v2308, %v2340
    %v2345 = vmul.f32 %v2309, %v2341
    %v2346 = vsub.f32 %v2294, %v2342
    %v2347 = vsub.f32 %v2295, %v2343
    %v2348 = vsub.f32 %v2296, %v2344
    %v2349 = vsub.f32 %v2297, %v2345
    %2351 = vset.pattern.permute.xlu0 0
    %2352 = vperm.xlu0 %2351, %v2338
    %v2353 = vpop.permute.xlu0 %2352
    %2356 = vset.pattern.permute.xlu0 0
    %2357 = vperm.xlu0 %2356, %v2339
    %v2358 = vpop.permute.xlu0 %2357
    %2361 = vset.pattern.permute.xlu0 0
    %2362 = vperm.xlu0 %2361, %v2340
    %v2363 = vpop.permute.xlu0 %2362
    %2366 = vset.pattern.permute.xlu0 0
    %2367 = vperm.xlu0 %2366, %v2341
    %v2368 = vpop.permute.xlu0 %2367
    %v2370 = vmul.f32 %v2276, %v2353
    %v2371 = vmul.f32 %v2279, %v2358
    %v2372 = vmul.f32 %v2284, %v2363
    %v2373 = vmul.f32 %v2287, %v2368
    %2375 = vset.pattern.permute.xlu0 0
    %2376 = vperm.xlu0 %2375, %v2346
    %v2377 = vpop.permute.xlu0 %2376
    %2380 = vset.pattern.permute.xlu0 0
    %2381 = vperm.xlu0 %2380, %v2347
    %v2382 = vpop.permute.xlu0 %2381
    %2385 = vset.pattern.permute.xlu0 0
    %2386 = vperm.xlu0 %2385, %v2348
    %v2387 = vpop.permute.xlu0 %2386
    %2390 = vset.pattern.permute.xlu0 0
    %2391 = vperm.xlu0 %2390, %v2349
    %v2392 = vpop.permute.xlu0 %2391
    %v2394 = vadd.f32 %v2370, %v2377
    %v2395 = vadd.f32 %v2371, %v2382
    %v2396 = vadd.f32 %v2372, %v2387
    %v2397 = vadd.f32 %v2373, %v2392
    %v2398 = vld [vmem:[%s1] sm:$0xf]
    %v2399 = vld [vmem:[%s1 + $0x4] sm:$0xf]
    %v2400 = vld [vmem:[%s5] sm:$0xf]
    %v2401 = vld [vmem:[%s5 + $0x4] sm:$0xf]
    %v2402 = vld [vmem:[%s5 + $0x8] sm:$0xf]
    %v2403 = vld [vmem:[%s5 + $0xc] sm:$0xf]
    %v2408 = vunpack.c.l.b16 %v2400
    %v2409 = vunpack.c.l.b16 %v2401
    %v2410 = vunpack.c.l.b16 %v2402
    %v2411 = vunpack.c.l.b16 %v2403
    %v2412 = vpack.c.b16 %v2409, %v2408
    %v2413 = vpack.c.b16 %v2411, %v2410
    %v2416 = vunpack.c.l.b16 %v2398
    %v2417 = vunpack.c.l.b16 %v2399
    %v2418 = vpack.c.b16 %v2417, %v2416
    %v2421 = vsel %vm80, %v2412, 0
    %v2424 = vsel %vm80, %v2413, 0
    %2426 = vmatprep.subr.bf16.mxu0 0
    %2427 = vmatpush1.bf16.msra.mxu0 %v2418
    %2428 = vmatprep.subr.bf16.mxu0 0
    %2429 = vmatpush1.bf16.msra.mxu0 0
    %2430 = vmatprep.subr.bf16.mxu0 0
    %2431 = vmatpush1.bf16.msra.mxu0 0
    %2432 = vmatprep.subr.bf16.mxu0 0
    %2433 = vmatpush1.bf16.msra.mxu0 0
    %2434 = vmatprep.subr.bf16.mxu0 0
    %2435 = vmatpush1.bf16.msra.mxu0 0
    %2436 = vmatprep.subr.bf16.mxu0 0
    %2437 = vmatpush1.bf16.msra.mxu0 0
    %2438 = vmatprep.subr.bf16.mxu0 0
    %2439 = vmatpush1.bf16.msra.mxu0 0
    %2440 = vmatprep.subr.bf16.mxu0 0
    %2441 = vmatpush1.bf16.msra.mxu0 0
    %2442 = vmatprep.subr.bf16.mxu0 0
    %2443 = vmatpush1.bf16.msra.mxu0 0
    %2444 = vmatprep.subr.bf16.mxu0 0
    %2445 = vmatpush1.bf16.msra.mxu0 0
    %2446 = vmatprep.subr.bf16.mxu0 0
    %2447 = vmatpush1.bf16.msra.mxu0 0
    %2448 = vmatprep.subr.bf16.mxu0 0
    %2449 = vmatpush1.bf16.msra.mxu0 0
    %2450 = vmatprep.subr.bf16.mxu0 0
    %2451 = vmatpush1.bf16.msra.mxu0 0
    %2452 = vmatprep.subr.bf16.mxu0 0
    %2453 = vmatpush1.bf16.msra.mxu0 0
    %2454 = vmatprep.subr.bf16.mxu0 0
    %2455 = vmatpush1.bf16.msra.mxu0 0
    %2456 = vmatprep.subr.bf16.mxu0 0
    %2457 = vmatpush1.bf16.msra.mxu0 0
    %2458 = vmatprep.mubr.bf16.mxu0 0
    %2459 = vmatmul.mubr.bf16.gmra.mrb[0].mxu0 %v2421
    %v2460 = vpop.f32.mrb[0].mxu0
    %v2461 = vadd.f32 0.0, %v2460
    %v2462 = vpop.f32.mrb[0].mxu0
    %v2463 = vpop.f32.mrb[0].mxu0
    %v2464 = vadd.f32 0.0, %v2463
    %v2465 = vpop.f32.mrb[0].mxu0
    %2466 = vmatprep.mubr.bf16.mxu0 0
    %2467 = vmatmul.mubr.bf16.gmra.mrb[0].mxu0 %v2424
    %v2468 = vpop.f32.mrb[0].mxu0
    %v2469 = vadd.f32 0.0, %v2468
    %v2470 = vpop.f32.mrb[0].mxu0
    %v2471 = vpop.f32.mrb[0].mxu0
    %v2472 = vadd.f32 0.0, %v2471
    %v2473 = vpop.f32.mrb[0].mxu0
    %2474 = vdwg.mxu0
    %v2475 = vld [vmem:[%s14] sm:$0xff]
    %v2476 = vld [vmem:[%s14 + $0x8] sm:$0xff]
    %v2477 = vld [vmem:[%s14 + $0x10] sm:$0xff]
    %v2478 = vld [vmem:[%s14 + $0x18] sm:$0xff]
    %v2479 = vld [vmem:[%s15] sm:$0xff]
    %v2480 = vld [vmem:[%s15 + $0x8] sm:$0xff]
    %v2481 = vld [vmem:[%s15 + $0x10] sm:$0xff]
    %v2482 = vld [vmem:[%s15 + $0x18] sm:$0xff]
    %2483 = vadd.xlane.f32.xlu0 %v2461
    %v2484 = vpop.xlane.xlu0 %2483
    %2485 = vadd.xlane.f32.xlu0 %v2464
    %v2486 = vpop.xlane.xlu0 %2485
    %2487 = vadd.xlane.f32.xlu0 %v2469
    %v2488 = vpop.xlane.xlu0 %2487
    %2489 = vadd.xlane.f32.xlu0 %v2472
    %v2490 = vpop.xlane.xlu0 %2489
    %v2491 = vmul.f32 %v2484, 0.0078125
    %v2492 = vmul.f32 %v2486, 0.0078125
    %v2493 = vmul.f32 %v2488, 0.0078125
    %v2494 = vmul.f32 %v2490, 0.0078125
    %v2495 = vsub.f32 %v2461, %v2491
    %v2496 = vsub.f32 %v2464, %v2492
    %v2497 = vsub.f32 %v2469, %v2493
    %v2498 = vsub.f32 %v2472, %v2494
    %v2499 = vmul.f32 %v2495, %v2495
    %v2500 = vmul.f32 %v2496, %v2496
    %v2501 = vmul.f32 %v2497, %v2497
    %v2502 = vmul.f32 %v2498, %v2498
    %2503 = vadd.xlane.f32.xlu0 %v2499
    %v2504 = vpop.xlane.xlu0 %2503
    %2505 = vadd.xlane.f32.xlu0 %v2500
    %v2506 = vpop.xlane.xlu0 %2505
    %2507 = vadd.xlane.f32.xlu0 %v2501
    %v2508 = vpop.xlane.xlu0 %2507
    %2509 = vadd.xlane.f32.xlu0 %v2502
    %v2510 = vpop.xlane.xlu0 %2509
    %v2511 = vmul.f32 %v2504, 0.0078125
    %v2512 = vmul.f32 %v2506, 0.0078125
    %v2513 = vmul.f32 %v2508, 0.0078125
    %v2514 = vmul.f32 %v2510, 0.0078125
    %v2515 = vadd.f32 %v2511, 1e-05
    %v2516 = vadd.f32 %v2512, 1e-05
    %v2517 = vadd.f32 %v2513, 1e-05
    %v2518 = vadd.f32 %v2514, 1e-05
    %v2519 = vrsqrt.pop %v2515
    %v2520 = vrsqrt.pop %v2516
    %v2521 = vrsqrt.pop %v2517
    %v2522 = vrsqrt.pop %v2518
    %v2523 = vmul.f32 %v2475, %v2519
    %v2524 = vmul.f32 %v2476, %v2520
    %v2525 = vmul.f32 %v2477, %v2521
    %v2526 = vmul.f32 %v2478, %v2522
    %v2527 = vmul.f32 %v2491, %v2523
    %v2528 = vmul.f32 %v2492, %v2524
    %v2529 = vmul.f32 %v2493, %v2525
    %v2530 = vmul.f32 %v2494, %v2526
    %v2531 = vsub.f32 %v2479, %v2527
    %v2532 = vsub.f32 %v2480, %v2528
    %v2533 = vsub.f32 %v2481, %v2529
    %v2534 = vsub.f32 %v2482, %v2530
    %2536 = vset.pattern.permute.xlu0 0
    %2537 = vperm.xlu0 %2536, %v2523
    %v2538 = vpop.permute.xlu0 %2537
    %2541 = vset.pattern.permute.xlu0 0
    %2542 = vperm.xlu0 %2541, %v2524
    %v2543 = vpop.permute.xlu0 %2542
    %2546 = vset.pattern.permute.xlu0 0
    %2547 = vperm.xlu0 %2546, %v2525
    %v2548 = vpop.permute.xlu0 %2547
    %2551 = vset.pattern.permute.xlu0 0
    %2552 = vperm.xlu0 %2551, %v2526
    %v2553 = vpop.permute.xlu0 %2552
    %v2555 = vmul.f32 %v2461, %v2538
    %v2556 = vmul.f32 %v2464, %v2543
    %v2557 = vmul.f32 %v2469, %v2548
    %v2558 = vmul.f32 %v2472, %v2553
    %2560 = vset.pattern.permute.xlu0 0
    %2561 = vperm.xlu0 %2560, %v2531
    %v2562 = vpop.permute.xlu0 %2561
    %2565 = vset.pattern.permute.xlu0 0
    %2566 = vperm.xlu0 %2565, %v2532
    %v2567 = vpop.permute.xlu0 %2566
    %2570 = vset.pattern.permute.xlu0 0
    %2571 = vperm.xlu0 %2570, %v2533
    %v2572 = vpop.permute.xlu0 %2571
    %2575 = vset.pattern.permute.xlu0 0
    %2576 = vperm.xlu0 %2575, %v2534
    %v2577 = vpop.permute.xlu0 %2576
    %v2579 = vadd.f32 %v2555, %v2562
    %v2580 = vadd.f32 %v2556, %v2567
    %v2581 = vadd.f32 %v2557, %v2572
    %v2582 = vadd.f32 %v2558, %v2577
    %v2583 = vadd.f32 %v2394, %v2579
    %v2584 = vadd.f32 %v2395, %v2580
    %v2585 = vadd.f32 %v2396, %v2581
    %v2586 = vadd.f32 %v2397, %v2582
    %v2587 = vmax.f32 %v2583, 0.0
    %v2588 = vmax.f32 %v2584, 0.0
    %v2589 = vmax.f32 %v2585, 0.0
    %v2590 = vmax.f32 %v2586, 0.0
    %2591 = vst [vmem:[#allocation4] sm:$0xff] %v2587
    %2592 = vst [vmem:[#allocation4 + $0x8] sm:$0xff] %v2588
    %2593 = vst [vmem:[#allocation4 + $0x10] sm:$0xff] %v2589
    %2594 = vst [vmem:[#allocation4 + $0x18] sm:$0xff] %v2590
    // Predicated region
    $region66: #{tpu_custom_call.1} parent=1 // pred_check
      _
    $region67: #{tpu_custom_call.1} parent=1 // pred_check_branch
      %2596 = sbr.rel (0) target = $region69
    $region68: #{tpu_custom_call.1} parent=1 // pred_region
      %s2598 = ssub.s32 512, 512
      %2599 = vsyncadd [#allocation5], %s2598
      %s2600 = sshll.u32 [#allocation4], 4
      %s2601 = int_to_ptr.vmem [resolvable:$true] %s2600
      %2606 = dma.vmem_to_hbm [thread:$0]  %s2601, 512, %s16, [#allocation5], 128, 128, 8
    $region69: #{tpu_custom_call.1} parent=1 // pred_fallthru
      _
    // Predicated region
    $region70: #{tpu_custom_call.1} parent=1 // pred_check
      _
    $region71: #{tpu_custom_call.1} parent=1 // pred_check_branch
      %2608 = sbr.rel (0) target = $region73
    $region72: #{tpu_custom_call.1} parent=1 // pred_region
      %2609 = dma.done [#allocation5], 512
    $region73: #{tpu_custom_call.1} parent=1 // pred_fallthru
      _
    %2610 = vsyncpa [#allocation5], 1

</llo_original>
